<compile_context>
chip_gen: v6e
topology: v6e:2x2x1
jax: 0.10.0
libtpu: 0.0.40
codegen_flags: <defaults>
</compile_context>

<pallas_src>
import functools

import jax
import jax.numpy as jnp
from jax.experimental import pallas as pl
from jax.experimental.pallas import tpu as pltpu

_OUT_W = 128  # lane-dense packed output width


def _head_kernel(lbl_ref, h_ref, wa1_ref, ba1_ref, wa2_ref, ba2_ref,
                 w1_ref, b1_ref, g1_ref, bt1_ref,
                 w2_ref, b2_ref, g2_ref, bt2_ref,
                 w3_ref, b3_ref, out_ref):
    h = h_ref[...]                                            # [TB, S, H] bf16
    TB, S, H = h.shape
    NC = w3_ref.shape[-1]                                     # 3 classes

    # --- attention pooling: Linear(H,512) -> Tanh -> Linear(512,1) -> Softmax(dim=1)
    # Flatten leading dims for one lane/sublane-friendly 2-D MXU matmul.
    h2 = h.reshape(TB * S, H)
    a = jnp.tanh(jnp.dot(h2, wa1_ref[...],
                         preferred_element_type=jnp.float32) + ba1_ref[...])  # [TB*S,512] f32
    # Lane-dense scores [TB, S] via VPU multiply + lane reduce (kept off the MXU).
    a3 = a.reshape(TB, S, a.shape[-1])
    scores = jnp.sum(a3 * wa2_ref[...].reshape(1, 1, -1), axis=-1) + ba2_ref[...]  # [TB, S]

    m = jnp.max(scores, axis=-1, keepdims=True)
    e = jnp.exp(scores - m)
    attn_w = e * pl.reciprocal(jnp.sum(e, axis=-1, keepdims=True), approx=True)    # [TB, S]

    # pooled[b,:] = sum_s attn_w[b,s] * h[b,s,:] -> batched MXU matmul, f32 accumulation.
    pooled = jax.lax.dot_general(
        attn_w.astype(jnp.bfloat16)[:, None, :], h,          # (TB,1,S) @ (TB,S,H)
        dimension_numbers=(((2,), (1,)), ((0,), (0,))),
        preferred_element_type=jnp.float32)[:, 0, :]          # [TB, H] f32

    def layernorm(x, gamma, beta, eps=1e-5):
        mu = jnp.mean(x, axis=-1, keepdims=True)
        var = jnp.mean((x - mu) * (x - mu), axis=-1, keepdims=True)
        return (x - mu) * jax.lax.rsqrt(var + eps) * gamma + beta

    def gelu(x):  # exact (erf) GELU, matching nn.GELU() default
        return 0.5 * x * (1.0 + jax.lax.erf(x * 0.7071067811865476))

    # --- classifier: Linear -> LN -> GELU -> (Dropout=id) -> Linear -> LN -> GELU -> Linear
    x = jnp.dot(pooled.astype(jnp.bfloat16), w1_ref[...],
                preferred_element_type=jnp.float32) + b1_ref[...]                   # [TB, 512]
    x = gelu(layernorm(x, g1_ref[...], bt1_ref[...]))
    x = jnp.dot(x.astype(jnp.bfloat16), w2_ref[...],
                preferred_element_type=jnp.float32) + b2_ref[...]                   # [TB, 128]
    x = gelu(layernorm(x, g2_ref[...], bt2_ref[...]))
    logits = jnp.dot(x.astype(jnp.bfloat16), w3_ref[...],
                     preferred_element_type=jnp.float32) + b3_ref[...]              # [TB, 3]

    # --- probabilities = softmax(logits, dim=1); exact divide for PyTorch parity.
    lmax = jnp.max(logits, axis=-1, keepdims=True)
    ex = jnp.exp(logits - lmax)
    denom = jnp.sum(ex, axis=-1, keepdims=True)
    probs = ex / denom
    log_probs = (logits - lmax) - jnp.log(denom)

    # --- per-example cross-entropy, targets built in-kernel from SMEM class labels.
    base = pl.program_id(0) * TB
    row_ids = jax.lax.broadcasted_iota(jnp.int32, (TB, 1), 0)
    cls = jnp.zeros((TB, 1), jnp.int32)
    for b in range(TB):                                       # TB is small & static
        cls = jnp.where(row_ids == b, lbl_ref[base + b], cls)
    onehot = (jax.lax.broadcasted_iota(jnp.int32, (TB, NC), 1) == cls).astype(jnp.float32)
    loss_rows = -jnp.sum(onehot * log_probs, axis=-1, keepdims=True)                # [TB, 1]

    # --- single lane-dense (TB, 128) output block: [0:3]=logits [3:6]=probs [6]=loss
    out_ref[...] = jnp.zeros(out_ref.shape, out_ref.dtype)
    out_ref[:, 0:NC] = logits
    out_ref[:, NC:2 * NC] = probs
    out_ref[:, 2 * NC:2 * NC + 1] = loss_rows


def _tpu_defaults():
    """(block_b, vmem_limit_bytes, hidden-input pipeline depth) per chip generation."""
    kind = ""
    try:
        kind = jax.devices()[0].device_kind.lower()
    except Exception:
        pass
    if "v7" in kind or "7x" in kind:
        # 64 MiB physical VMEM: tight scoped limit, default 2-deep h pipeline.
        return 8, 40 * 1024 * 1024, 2
    if "v6" in kind:
        return 16, 96 * 1024 * 1024, 3
    if "v5" in kind:
        return 16, 80 * 1024 * 1024, 3
    return 8, 48 * 1024 * 1024, 2


def _pick_tb(B, block_b):
    # Batch tile must divide B; keep it a multiple of 8 (or the full batch) so the
    # (TB, 128) output block stays sublane-aligned.
    for d in range(min(block_b, B), 0, -1):
        if B % d == 0 and (d % 8 == 0 or d == B):
            return d
    return B


def _block_spec(shape, index_map, buffers=None):
    # Graceful fallback if the installed BlockSpec does not take pipeline_mode.
    if buffers is None:
        return pl.BlockSpec(shape, index_map)
    try:
        return pl.BlockSpec(shape, index_map, pipeline_mode=pl.Buffered(buffers))
    except TypeError:
        return pl.BlockSpec(shape, index_map)


@functools.partial(jax.jit, static_argnames=("block_b", "vmem_limit_bytes", "h_buffers"))
def _enhanced_sentiment_head(hidden_states, params, labels, *,
                             block_b, vmem_limit_bytes, h_buffers):
    B, S, H = hidden_states.shape
    TB = _pick_tb(B, block_b)
    grid_len = B // TB
    h_buf = max(1, min(h_buffers, grid_len))

    # bf16 for the MXU paths; every matmul accumulates in f32 inside the kernel.
    h_bf16 = hidden_states.astype(jnp.bfloat16)
    wa1 = params["wa1"].astype(jnp.bfloat16)
    w1 = params["w1"].astype(jnp.bfloat16)
    w2 = params["w2"].astype(jnp.bfloat16)
    w3 = params["w3"].astype(jnp.bfloat16)
    wa2_row = params["wa2"].reshape(1, -1)                    # (512, 1) -> (1, 512)
    class_labels = (labels.reshape(-1) + 1).astype(jnp.int32)  # class = label + 1, via SMEM

    flat = (wa1, params["ba1"], wa2_row, params["ba2"],
            w1, params["b1"], params["g1"], params["bt1"],
            w2, params["b2"], params["g2"], params["bt2"],
            w3, params["b3"])

    def full(x):  # whole-array resident VMEM block: constant index map, single-buffered
        return _block_spec(x.shape, lambda i, lbl: (0,) * x.ndim, buffers=1)

    grid_spec = pltpu.PrefetchScalarGridSpec(
        num_scalar_prefetch=1,
        grid=(grid_len,),
        in_specs=[_block_spec((TB, S, H), lambda i, lbl: (i, 0, 0), buffers=h_buf)]
                 + [full(x) for x in flat],
        out_specs=pl.BlockSpec((TB, _OUT_W), lambda i, lbl: (i, 0)),
    )
    packed = pl.pallas_call(
        _head_kernel,
        out_shape=jax.ShapeDtypeStruct((B, _OUT_W), jnp.float32),
        grid_spec=grid_spec,
        compiler_params=pltpu.CompilerParams(
            dimension_semantics=("parallel",),
            vmem_limit_bytes=vmem_limit_bytes),
    )(class_labels, h_bf16, *flat)

    logits = packed[:, 0:3]
    probs = packed[:, 3:6]
    loss_vec = packed[:, 6:7]
    # Mean over the *global* batch in the wrapper -> batch grid axis stays "parallel".
    return {"loss": jnp.mean(loss_vec), "logits": logits, "probabilities": probs}


def enhanced_sentiment_head(hidden_states, params, labels, *,
                            block_b=None, vmem_limit_bytes=None, h_buffers=None):
    """hidden_states: [B, S, H] float, labels: [B] int32 in {-1, 0, 1}."""
    d_b, d_v, d_h = _tpu_defaults()
    return _enhanced_sentiment_head(
        hidden_states, params, labels,
        block_b=block_b if block_b is not None else d_b,
        vmem_limit_bytes=vmem_limit_bytes if vmem_limit_bytes is not None else d_v,
        h_buffers=h_buffers if h_buffers is not None else d_h)


def _xavier_normal(key, fan_in, fan_out, gain):
    std = gain * jnp.sqrt(2.0 / (fan_in + fan_out))
    return std * jax.random.normal(key, (fan_in, fan_out), dtype=jnp.float32)


def init_params(key, hidden_size):
    ks = jax.random.split(key, 5)
    d1, d2, nc = 512, 128, 3
    return {
        # attention pooling head (default-style init; deterministic, synthetic)
        "wa1": _xavier_normal(ks[0], hidden_size, d1, 1.0),
        "ba1": jnp.zeros((1, d1), jnp.float32),
        "wa2": _xavier_normal(ks[1], d1, 1, 1.0),
        "ba2": jnp.zeros((1, 1), jnp.float32),
        # classifier: xavier_normal(gain=0.5), zero bias, LayerNorm gamma=1 beta=0
        "w1": _xavier_normal(ks[2], hidden_size, d1, 0.5),
        "b1": jnp.zeros((1, d1), jnp.float32),
        "g1": jnp.ones((1, d1), jnp.float32),
        "bt1": jnp.zeros((1, d1), jnp.float32),
        "w2": _xavier_normal(ks[3], d1, d2, 0.5),
        "b2": jnp.zeros((1, d2), jnp.float32),
        "g2": jnp.ones((1, d2), jnp.float32),
        "bt2": jnp.zeros((1, d2), jnp.float32),
        "w3": _xavier_normal(ks[4], d2, nc, 0.5),
        "b3": jnp.zeros((1, nc), jnp.float32),
    }


if __name__ == "__main__":
    key = jax.random.PRNGKey(0)
    B, S, H = 16, 8, 64           # small stand-in for roberta-large's [B, 512, 1024]
    k_h, k_p, k_l = jax.random.split(key, 3)

    hidden_states = jax.random.normal(k_h, (B, S, H), dtype=jnp.float32)
    labels = jax.random.randint(k_l, (B,), -1, 2, dtype=jnp.int32)  # in {-1, 0, 1}
    params = init_params(k_p, H)

    out = enhanced_sentiment_head(hidden_states, params, labels)
    jax.block_until_ready(out)
    print("KERNEL_OK")
</pallas_src>

<mosaic_0001>
module attributes {stable_mosaic.version = 11 : i64} {
  func.func @_head_kernel(%arg0: i32, %arg1: memref<16xi32, #tpu.memory_space<smem>>, %arg2: memref<8x8x64xbf16, #tpu.memory_space<vmem>>, %arg3: memref<64x512xbf16, #tpu.memory_space<vmem>>, %arg4: memref<1x512xf32, #tpu.memory_space<vmem>>, %arg5: memref<1x512xf32, #tpu.memory_space<vmem>>, %arg6: memref<1x1xf32, #tpu.memory_space<vmem>>, %arg7: memref<64x512xbf16, #tpu.memory_space<vmem>>, %arg8: memref<1x512xf32, #tpu.memory_space<vmem>>, %arg9: memref<1x512xf32, #tpu.memory_space<vmem>>, %arg10: memref<1x512xf32, #tpu.memory_space<vmem>>, %arg11: memref<512x128xbf16, #tpu.memory_space<vmem>>, %arg12: memref<1x128xf32, #tpu.memory_space<vmem>>, %arg13: memref<1x128xf32, #tpu.memory_space<vmem>>, %arg14: memref<1x128xf32, #tpu.memory_space<vmem>>, %arg15: memref<128x3xbf16, #tpu.memory_space<vmem>>, %arg16: memref<1x3xf32, #tpu.memory_space<vmem>>, %arg17: memref<8x128xf32, #tpu.memory_space<vmem>>) attributes {dimension_semantics = [#tpu.dimension_semantics<parallel>], iteration_bounds = array<i64: 2>, scalar_prefetch = 1 : i64, scratch_operands = 0 : i64, tpu.core_type = #tpu.core_type<tc>, window_params = [{pipeline_mode = #tpu.pipeline_mode<double_buffered>, transform_indices = @transform_0, window_bounds = array<i64: 8, 8, 64>}, {pipeline_mode = #tpu.pipeline_mode<synchronous>, transform_indices = @transform_1, window_bounds = array<i64: 64, 512>}, {pipeline_mode = #tpu.pipeline_mode<synchronous>, transform_indices = @transform_2, window_bounds = array<i64: 1, 512>}, {pipeline_mode = #tpu.pipeline_mode<synchronous>, transform_indices = @transform_3, window_bounds = array<i64: 1, 512>}, {pipeline_mode = #tpu.pipeline_mode<synchronous>, transform_indices = @transform_4, window_bounds = array<i64: 1, 1>}, {pipeline_mode = #tpu.pipeline_mode<synchronous>, transform_indices = @transform_5, window_bounds = array<i64: 64, 512>}, {pipeline_mode = #tpu.pipeline_mode<synchronous>, transform_indices = @transform_6, window_bounds = array<i64: 1, 512>}, {pipeline_mode = #tpu.pipeline_mode<synchronous>, transform_indices = @transform_7, window_bounds = array<i64: 1, 512>}, {pipeline_mode = #tpu.pipeline_mode<synchronous>, transform_indices = @transform_8, window_bounds = array<i64: 1, 512>}, {pipeline_mode = #tpu.pipeline_mode<synchronous>, transform_indices = @transform_9, window_bounds = array<i64: 512, 128>}, {pipeline_mode = #tpu.pipeline_mode<synchronous>, transform_indices = @transform_10, window_bounds = array<i64: 1, 128>}, {pipeline_mode = #tpu.pipeline_mode<synchronous>, transform_indices = @transform_11, window_bounds = array<i64: 1, 128>}, {pipeline_mode = #tpu.pipeline_mode<synchronous>, transform_indices = @transform_12, window_bounds = array<i64: 1, 128>}, {pipeline_mode = #tpu.pipeline_mode<synchronous>, transform_indices = @transform_13, window_bounds = array<i64: 128, 3>}, {pipeline_mode = #tpu.pipeline_mode<synchronous>, transform_indices = @transform_14, window_bounds = array<i64: 1, 3>}, {transform_indices = @transform_15, window_bounds = array<i64: 8, 128>}]} {
    %c0 = arith.constant 0 : index
    %c0_0 = arith.constant 0 : index
    %c0_1 = arith.constant 0 : index
    %0 = vector.load %arg2[%c0, %c0_0, %c0_1] : memref<8x8x64xbf16, #tpu.memory_space<vmem>>, vector<8x8x64xbf16>
    %1 = vector.shape_cast %0 : vector<8x8x64xbf16> to vector<64x64xbf16>
    %c0_2 = arith.constant 0 : index
    %c0_3 = arith.constant 0 : index
    %2 = vector.load %arg3[%c0_2, %c0_3] : memref<64x512xbf16, #tpu.memory_space<vmem>>, vector<64x512xbf16>
    %cst = arith.constant dense<0.000000e+00> : vector<64x512xf32>
    %3 = tpu.matmul %1, %2, %cst {dimension_numbers = #tpu.dot_dimension_numbers<[1], [0], [0], [1], [0, 0, 1, 1], [], []>} : vector<64x64xbf16>, vector<64x512xbf16>, vector<64x512xf32> -> vector<64x512xf32>
    %c0_4 = arith.constant 0 : index
    %c0_5 = arith.constant 0 : index
    %4 = vector.load %arg4[%c0_4, %c0_5] : memref<1x512xf32, #tpu.memory_space<vmem>>, vector<1x512xf32>
    %5 = vector.broadcast %4 : vector<1x512xf32> to vector<64x512xf32>
    %6 = arith.addf %3, %5 : vector<64x512xf32>
    %7 = math.tanh %6 : vector<64x512xf32>
    %8 = vector.shape_cast %7 : vector<64x512xf32> to vector<8x8x512xf32>
    %c0_6 = arith.constant 0 : index
    %c0_7 = arith.constant 0 : index
    %9 = vector.load %arg5[%c0_6, %c0_7] : memref<1x512xf32, #tpu.memory_space<vmem>>, vector<1x512xf32>
    %10 = vector.shape_cast %9 : vector<1x512xf32> to vector<1x1x512xf32>
    %11 = vector.broadcast %10 : vector<1x1x512xf32> to vector<8x8x512xf32>
    %12 = arith.mulf %8, %11 : vector<8x8x512xf32>
    %cst_8 = arith.constant dense<0.000000e+00> : vector<8x8xf32>
    %13 = vector.multi_reduction <add>, %12, %cst_8 [2] : vector<8x8x512xf32> to vector<8x8xf32>
    %c0_9 = arith.constant 0 : index
    %c0_10 = arith.constant 0 : index
    %14 = vector.load %arg6[%c0_9, %c0_10] : memref<1x1xf32, #tpu.memory_space<vmem>>, vector<1x1xf32>
    %15 = vector.broadcast %14 : vector<1x1xf32> to vector<8x8xf32>
    %16 = arith.addf %13, %15 : vector<8x8xf32>
    %cst_11 = arith.constant dense<0xFF800000> : vector<8xf32>
    %17 = vector.multi_reduction <maximumf>, %16, %cst_11 [1] : vector<8x8xf32> to vector<8xf32>
    %18 = vector.shape_cast %17 : vector<8xf32> to vector<8x1xf32>
    %19 = vector.broadcast %18 : vector<8x1xf32> to vector<8x8xf32>
    %20 = arith.subf %16, %19 : vector<8x8xf32>
    %21 = math.exp %20 : vector<8x8xf32>
    %cst_12 = arith.constant dense<0.000000e+00> : vector<8xf32>
    %22 = vector.multi_reduction <add>, %21, %cst_12 [1] : vector<8x8xf32> to vector<8xf32>
    %23 = vector.shape_cast %22 : vector<8xf32> to vector<8x1xf32>
    %24 = tpu.reciprocal %23 {approx = true} : vector<8x1xf32> -> vector<8x1xf32>
    %25 = vector.broadcast %24 : vector<8x1xf32> to vector<8x8xf32>
    %26 = arith.mulf %21, %25 : vector<8x8xf32>
    %27 = arith.truncf %26 : vector<8x8xf32> to vector<8x8xbf16>
    %28 = vector.shape_cast %27 : vector<8x8xbf16> to vector<8x1x8xbf16>
    %cst_13 = arith.constant dense<0.000000e+00> : vector<8x1x64xf32>
    %29 = tpu.matmul %28, %0, %cst_13 {dimension_numbers = #tpu.dot_dimension_numbers<[2], [1], [1], [2], [0, 0, 0, 1, 1, 2], [0], [0]>} : vector<8x1x8xbf16>, vector<8x8x64xbf16>, vector<8x1x64xf32> -> vector<8x1x64xf32>
    %30 = vector.shape_cast %29 : vector<8x1x64xf32> to vector<8x64xf32>
    %31 = arith.truncf %30 : vector<8x64xf32> to vector<8x64xbf16>
    %c0_14 = arith.constant 0 : index
    %c0_15 = arith.constant 0 : index
    %32 = vector.load %arg7[%c0_14, %c0_15] : memref<64x512xbf16, #tpu.memory_space<vmem>>, vector<64x512xbf16>
    %cst_16 = arith.constant dense<0.000000e+00> : vector<8x512xf32>
    %33 = tpu.matmul %31, %32, %cst_16 {dimension_numbers = #tpu.dot_dimension_numbers<[1], [0], [0], [1], [0, 0, 1, 1], [], []>} : vector<8x64xbf16>, vector<64x512xbf16>, vector<8x512xf32> -> vector<8x512xf32>
    %c0_17 = arith.constant 0 : index
    %c0_18 = arith.constant 0 : index
    %34 = vector.load %arg8[%c0_17, %c0_18] : memref<1x512xf32, #tpu.memory_space<vmem>>, vector<1x512xf32>
    %35 = vector.broadcast %34 : vector<1x512xf32> to vector<8x512xf32>
    %36 = arith.addf %33, %35 : vector<8x512xf32>
    %c0_19 = arith.constant 0 : index
    %c0_20 = arith.constant 0 : index
    %37 = vector.load %arg9[%c0_19, %c0_20] : memref<1x512xf32, #tpu.memory_space<vmem>>, vector<1x512xf32>
    %c0_21 = arith.constant 0 : index
    %c0_22 = arith.constant 0 : index
    %38 = vector.load %arg10[%c0_21, %c0_22] : memref<1x512xf32, #tpu.memory_space<vmem>>, vector<1x512xf32>
    %cst_23 = arith.constant dense<0.000000e+00> : vector<8xf32>
    %39 = vector.multi_reduction <add>, %36, %cst_23 [1] : vector<8x512xf32> to vector<8xf32>
    %40 = vector.shape_cast %39 : vector<8xf32> to vector<8x1xf32>
    %cst_24 = arith.constant 5.120000e+02 : f32
    %41 = vector.broadcast %cst_24 : f32 to vector<8x1xf32>
    %42 = arith.divf %40, %41 : vector<8x1xf32>
    %43 = vector.broadcast %42 : vector<8x1xf32> to vector<8x512xf32>
    %44 = arith.subf %36, %43 : vector<8x512xf32>
    %45 = vector.broadcast %42 : vector<8x1xf32> to vector<8x512xf32>
    %46 = arith.subf %36, %45 : vector<8x512xf32>
    %47 = arith.mulf %44, %46 : vector<8x512xf32>
    %cst_25 = arith.constant dense<0.000000e+00> : vector<8xf32>
    %48 = vector.multi_reduction <add>, %47, %cst_25 [1] : vector<8x512xf32> to vector<8xf32>
    %49 = vector.shape_cast %48 : vector<8xf32> to vector<8x1xf32>
    %cst_26 = arith.constant 5.120000e+02 : f32
    %50 = vector.broadcast %cst_26 : f32 to vector<8x1xf32>
    %51 = arith.divf %49, %50 : vector<8x1xf32>
    %52 = vector.broadcast %42 : vector<8x1xf32> to vector<8x512xf32>
    %53 = arith.subf %36, %52 : vector<8x512xf32>
    %cst_27 = arith.constant 9.99999974E-6 : f32
    %54 = vector.broadcast %cst_27 : f32 to vector<8x1xf32>
    %55 = arith.addf %51, %54 : vector<8x1xf32>
    %56 = math.rsqrt %55 : vector<8x1xf32>
    %57 = vector.broadcast %56 : vector<8x1xf32> to vector<8x512xf32>
    %58 = arith.mulf %53, %57 : vector<8x512xf32>
    %59 = vector.broadcast %37 : vector<1x512xf32> to vector<8x512xf32>
    %60 = arith.mulf %58, %59 : vector<8x512xf32>
    %61 = vector.broadcast %38 : vector<1x512xf32> to vector<8x512xf32>
    %62 = arith.addf %60, %61 : vector<8x512xf32>
    %cst_28 = arith.constant 5.000000e-01 : f32
    %63 = vector.broadcast %cst_28 : f32 to vector<8x512xf32>
    %64 = arith.mulf %63, %62 : vector<8x512xf32>
    %cst_29 = arith.constant 0.707106769 : f32
    %65 = vector.broadcast %cst_29 : f32 to vector<8x512xf32>
    %66 = arith.mulf %62, %65 : vector<8x512xf32>
    %67 = math.erf %66 : vector<8x512xf32>
    %cst_30 = arith.constant 1.000000e+00 : f32
    %68 = vector.broadcast %cst_30 : f32 to vector<8x512xf32>
    %69 = arith.addf %68, %67 : vector<8x512xf32>
    %70 = arith.mulf %64, %69 : vector<8x512xf32>
    %71 = arith.truncf %70 : vector<8x512xf32> to vector<8x512xbf16>
    %c0_31 = arith.constant 0 : index
    %c0_32 = arith.constant 0 : index
    %72 = vector.load %arg11[%c0_31, %c0_32] : memref<512x128xbf16, #tpu.memory_space<vmem>>, vector<512x128xbf16>
    %cst_33 = arith.constant dense<0.000000e+00> : vector<8x128xf32>
    %73 = tpu.matmul %71, %72, %cst_33 {dimension_numbers = #tpu.dot_dimension_numbers<[1], [0], [0], [1], [0, 0, 1, 1], [], []>} : vector<8x512xbf16>, vector<512x128xbf16>, vector<8x128xf32> -> vector<8x128xf32>
    %c0_34 = arith.constant 0 : index
    %c0_35 = arith.constant 0 : index
    %74 = vector.load %arg12[%c0_34, %c0_35] : memref<1x128xf32, #tpu.memory_space<vmem>>, vector<1x128xf32>
    %75 = vector.broadcast %74 : vector<1x128xf32> to vector<8x128xf32>
    %76 = arith.addf %73, %75 : vector<8x128xf32>
    %c0_36 = arith.constant 0 : index
    %c0_37 = arith.constant 0 : index
    %77 = vector.load %arg13[%c0_36, %c0_37] : memref<1x128xf32, #tpu.memory_space<vmem>>, vector<1x128xf32>
    %c0_38 = arith.constant 0 : index
    %c0_39 = arith.constant 0 : index
    %78 = vector.load %arg14[%c0_38, %c0_39] : memref<1x128xf32, #tpu.memory_space<vmem>>, vector<1x128xf32>
    %cst_40 = arith.constant dense<0.000000e+00> : vector<8xf32>
    %79 = vector.multi_reduction <add>, %76, %cst_40 [1] : vector<8x128xf32> to vector<8xf32>
    %80 = vector.shape_cast %79 : vector<8xf32> to vector<8x1xf32>
    %cst_41 = arith.constant 1.280000e+02 : f32
    %81 = vector.broadcast %cst_41 : f32 to vector<8x1xf32>
    %82 = arith.divf %80, %81 : vector<8x1xf32>
    %83 = vector.broadcast %82 : vector<8x1xf32> to vector<8x128xf32>
    %84 = arith.subf %76, %83 : vector<8x128xf32>
    %85 = vector.broadcast %82 : vector<8x1xf32> to vector<8x128xf32>
    %86 = arith.subf %76, %85 : vector<8x128xf32>
    %87 = arith.mulf %84, %86 : vector<8x128xf32>
    %cst_42 = arith.constant dense<0.000000e+00> : vector<8xf32>
    %88 = vector.multi_reduction <add>, %87, %cst_42 [1] : vector<8x128xf32> to vector<8xf32>
    %89 = vector.shape_cast %88 : vector<8xf32> to vector<8x1xf32>
    %cst_43 = arith.constant 1.280000e+02 : f32
    %90 = vector.broadcast %cst_43 : f32 to vector<8x1xf32>
    %91 = arith.divf %89, %90 : vector<8x1xf32>
    %92 = vector.broadcast %82 : vector<8x1xf32> to vector<8x128xf32>
    %93 = arith.subf %76, %92 : vector<8x128xf32>
    %cst_44 = arith.constant 9.99999974E-6 : f32
    %94 = vector.broadcast %cst_44 : f32 to vector<8x1xf32>
    %95 = arith.addf %91, %94 : vector<8x1xf32>
    %96 = math.rsqrt %95 : vector<8x1xf32>
    %97 = vector.broadcast %96 : vector<8x1xf32> to vector<8x128xf32>
    %98 = arith.mulf %93, %97 : vector<8x128xf32>
    %99 = vector.broadcast %77 : vector<1x128xf32> to vector<8x128xf32>
    %100 = arith.mulf %98, %99 : vector<8x128xf32>
    %101 = vector.broadcast %78 : vector<1x128xf32> to vector<8x128xf32>
    %102 = arith.addf %100, %101 : vector<8x128xf32>
    %cst_45 = arith.constant 5.000000e-01 : f32
    %103 = vector.broadcast %cst_45 : f32 to vector<8x128xf32>
    %104 = arith.mulf %103, %102 : vector<8x128xf32>
    %cst_46 = arith.constant 0.707106769 : f32
    %105 = vector.broadcast %cst_46 : f32 to vector<8x128xf32>
    %106 = arith.mulf %102, %105 : vector<8x128xf32>
    %107 = math.erf %106 : vector<8x128xf32>
    %cst_47 = arith.constant 1.000000e+00 : f32
    %108 = vector.broadcast %cst_47 : f32 to vector<8x128xf32>
    %109 = arith.addf %108, %107 : vector<8x128xf32>
    %110 = arith.mulf %104, %109 : vector<8x128xf32>
    %111 = arith.truncf %110 : vector<8x128xf32> to vector<8x128xbf16>
    %c0_48 = arith.constant 0 : index
    %c0_49 = arith.constant 0 : index
    %112 = vector.load %arg15[%c0_48, %c0_49] : memref<128x3xbf16, #tpu.memory_space<vmem>>, vector<128x3xbf16>
    %cst_50 = arith.constant dense<0.000000e+00> : vector<8x3xf32>
    %113 = tpu.matmul %111, %112, %cst_50 {dimension_numbers = #tpu.dot_dimension_numbers<[1], [0], [0], [1], [0, 0, 1, 1], [], []>} : vector<8x128xbf16>, vector<128x3xbf16>, vector<8x3xf32> -> vector<8x3xf32>
    %c0_51 = arith.constant 0 : index
    %c0_52 = arith.constant 0 : index
    %114 = vector.load %arg16[%c0_51, %c0_52] : memref<1x3xf32, #tpu.memory_space<vmem>>, vector<1x3xf32>
    %115 = vector.broadcast %114 : vector<1x3xf32> to vector<8x3xf32>
    %116 = arith.addf %113, %115 : vector<8x3xf32>
    %cst_53 = arith.constant dense<0xFF800000> : vector<8xf32>
    %117 = vector.multi_reduction <maximumf>, %116, %cst_53 [1] : vector<8x3xf32> to vector<8xf32>
    %118 = vector.shape_cast %117 : vector<8xf32> to vector<8x1xf32>
    %119 = vector.broadcast %118 : vector<8x1xf32> to vector<8x3xf32>
    %120 = arith.subf %116, %119 : vector<8x3xf32>
    %121 = math.exp %120 : vector<8x3xf32>
    %cst_54 = arith.constant dense<0.000000e+00> : vector<8xf32>
    %122 = vector.multi_reduction <add>, %121, %cst_54 [1] : vector<8x3xf32> to vector<8xf32>
    %123 = vector.shape_cast %122 : vector<8xf32> to vector<8x1xf32>
    %124 = vector.broadcast %123 : vector<8x1xf32> to vector<8x3xf32>
    %125 = arith.divf %121, %124 : vector<8x3xf32>
    %126 = vector.broadcast %118 : vector<8x1xf32> to vector<8x3xf32>
    %127 = arith.subf %116, %126 : vector<8x3xf32>
    %128 = math.log %123 : vector<8x1xf32>
    %129 = vector.broadcast %128 : vector<8x1xf32> to vector<8x3xf32>
    %130 = arith.subf %127, %129 : vector<8x3xf32>
    %c8_i32 = arith.constant 8 : i32
    %131 = arith.muli %arg0, %c8_i32 : i32
    %132 = tpu.iota {dimensions = array<i32: 0>} : vector<8x1xi32>
    %c0_i32 = arith.constant 0 : i32
    %133 = vector.broadcast %c0_i32 : i32 to vector<8x1xi32>
    %c0_i32_55 = arith.constant 0 : i32
    %134 = vector.broadcast %c0_i32_55 : i32 to vector<8x1xi32>
    %135 = arith.cmpi eq, %132, %134 : vector<8x1xi32>
    %c0_i32_56 = arith.constant 0 : i32
    %136 = arith.addi %131, %c0_i32_56 : i32
    %137 = arith.index_cast %136 : i32 to index
    %138 = memref.load %arg1[%137] : memref<16xi32, #tpu.memory_space<smem>>
    %139 = vector.broadcast %138 : i32 to vector<8x1xi32>
    %140 = arith.select %135, %139, %133 : vector<8x1xi1>, vector<8x1xi32>
    %c1_i32 = arith.constant 1 : i32
    %141 = vector.broadcast %c1_i32 : i32 to vector<8x1xi32>
    %142 = arith.cmpi eq, %132, %141 : vector<8x1xi32>
    %c1_i32_57 = arith.constant 1 : i32
    %143 = arith.addi %131, %c1_i32_57 : i32
    %144 = arith.index_cast %143 : i32 to index
    %145 = memref.load %arg1[%144] : memref<16xi32, #tpu.memory_space<smem>>
    %146 = vector.broadcast %145 : i32 to vector<8x1xi32>
    %147 = arith.select %142, %146, %140 : vector<8x1xi1>, vector<8x1xi32>
    %c2_i32 = arith.constant 2 : i32
    %148 = vector.broadcast %c2_i32 : i32 to vector<8x1xi32>
    %149 = arith.cmpi eq, %132, %148 : vector<8x1xi32>
    %c2_i32_58 = arith.constant 2 : i32
    %150 = arith.addi %131, %c2_i32_58 : i32
    %151 = arith.index_cast %150 : i32 to index
    %152 = memref.load %arg1[%151] : memref<16xi32, #tpu.memory_space<smem>>
    %153 = vector.broadcast %152 : i32 to vector<8x1xi32>
    %154 = arith.select %149, %153, %147 : vector<8x1xi1>, vector<8x1xi32>
    %c3_i32 = arith.constant 3 : i32
    %155 = vector.broadcast %c3_i32 : i32 to vector<8x1xi32>
    %156 = arith.cmpi eq, %132, %155 : vector<8x1xi32>
    %c3_i32_59 = arith.constant 3 : i32
    %157 = arith.addi %131, %c3_i32_59 : i32
    %158 = arith.index_cast %157 : i32 to index
    %159 = memref.load %arg1[%158] : memref<16xi32, #tpu.memory_space<smem>>
    %160 = vector.broadcast %159 : i32 to vector<8x1xi32>
    %161 = arith.select %156, %160, %154 : vector<8x1xi1>, vector<8x1xi32>
    %c4_i32 = arith.constant 4 : i32
    %162 = vector.broadcast %c4_i32 : i32 to vector<8x1xi32>
    %163 = arith.cmpi eq, %132, %162 : vector<8x1xi32>
    %c4_i32_60 = arith.constant 4 : i32
    %164 = arith.addi %131, %c4_i32_60 : i32
    %165 = arith.index_cast %164 : i32 to index
    %166 = memref.load %arg1[%165] : memref<16xi32, #tpu.memory_space<smem>>
    %167 = vector.broadcast %166 : i32 to vector<8x1xi32>
    %168 = arith.select %163, %167, %161 : vector<8x1xi1>, vector<8x1xi32>
    %c5_i32 = arith.constant 5 : i32
    %169 = vector.broadcast %c5_i32 : i32 to vector<8x1xi32>
    %170 = arith.cmpi eq, %132, %169 : vector<8x1xi32>
    %c5_i32_61 = arith.constant 5 : i32
    %171 = arith.addi %131, %c5_i32_61 : i32
    %172 = arith.index_cast %171 : i32 to index
    %173 = memref.load %arg1[%172] : memref<16xi32, #tpu.memory_space<smem>>
    %174 = vector.broadcast %173 : i32 to vector<8x1xi32>
    %175 = arith.select %170, %174, %168 : vector<8x1xi1>, vector<8x1xi32>
    %c6_i32 = arith.constant 6 : i32
    %176 = vector.broadcast %c6_i32 : i32 to vector<8x1xi32>
    %177 = arith.cmpi eq, %132, %176 : vector<8x1xi32>
    %c6_i32_62 = arith.constant 6 : i32
    %178 = arith.addi %131, %c6_i32_62 : i32
    %179 = arith.index_cast %178 : i32 to index
    %180 = memref.load %arg1[%179] : memref<16xi32, #tpu.memory_space<smem>>
    %181 = vector.broadcast %180 : i32 to vector<8x1xi32>
    %182 = arith.select %177, %181, %175 : vector<8x1xi1>, vector<8x1xi32>
    %c7_i32 = arith.constant 7 : i32
    %183 = vector.broadcast %c7_i32 : i32 to vector<8x1xi32>
    %184 = arith.cmpi eq, %132, %183 : vector<8x1xi32>
    %c7_i32_63 = arith.constant 7 : i32
    %185 = arith.addi %131, %c7_i32_63 : i32
    %186 = arith.index_cast %185 : i32 to index
    %187 = memref.load %arg1[%186] : memref<16xi32, #tpu.memory_space<smem>>
    %188 = vector.broadcast %187 : i32 to vector<8x1xi32>
    %189 = arith.select %184, %188, %182 : vector<8x1xi1>, vector<8x1xi32>
    %190 = tpu.iota {dimensions = array<i32: 1>} : vector<8x3xi32>
    %191 = vector.broadcast %189 : vector<8x1xi32> to vector<8x3xi32>
    %192 = arith.cmpi eq, %190, %191 : vector<8x3xi32>
    %193 = arith.extui %192 : vector<8x3xi1> to vector<8x3xi32>
    %194 = arith.sitofp %193 : vector<8x3xi32> to vector<8x3xf32>
    %195 = arith.mulf %194, %130 : vector<8x3xf32>
    %cst_64 = arith.constant dense<0.000000e+00> : vector<8xf32>
    %196 = vector.multi_reduction <add>, %195, %cst_64 [1] : vector<8x3xf32> to vector<8xf32>
    %197 = vector.shape_cast %196 : vector<8xf32> to vector<8x1xf32>
    %cst_65 = arith.constant 0.000000e+00 : f32
    %198 = vector.broadcast %cst_65 : f32 to vector<8x1xf32>
    %199 = arith.subf %198, %197 : vector<8x1xf32>
    %cst_66 = arith.constant 0.000000e+00 : f32
    %200 = vector.broadcast %cst_66 : f32 to vector<8x128xf32>
    %c0_67 = arith.constant 0 : index
    %c0_68 = arith.constant 0 : index
    %201 = vector.load %arg17[%c0_67, %c0_68] : memref<8x128xf32, #tpu.memory_space<vmem>>, vector<8x128xf32>
    tpu.vector_store %arg17[%c0_67, %c0_68], %200 {strides = array<i32>} : memref<8x128xf32, #tpu.memory_space<vmem>>, vector<8x128xf32>,
    %c0_69 = arith.constant 0 : index
    %c0_70 = arith.constant 0 : index
    %202 = vector.load %arg17[%c0_69, %c0_70] : memref<8x128xf32, #tpu.memory_space<vmem>>, vector<8x3xf32>
    tpu.vector_store %arg17[%c0_69, %c0_70], %116 {strides = array<i32>} : memref<8x128xf32, #tpu.memory_space<vmem>>, vector<8x3xf32>,
    %c0_71 = arith.constant 0 : index
    %c3 = arith.constant 3 : index
    %203 = vector.load %arg17[%c0_71, %c3] : memref<8x128xf32, #tpu.memory_space<vmem>>, vector<8x3xf32>
    tpu.vector_store %arg17[%c0_71, %c3], %125 {strides = array<i32>} : memref<8x128xf32, #tpu.memory_space<vmem>>, vector<8x3xf32>,
    %c0_72 = arith.constant 0 : index
    %c6 = arith.constant 6 : index
    %204 = vector.load %arg17[%c0_72, %c6] : memref<8x128xf32, #tpu.memory_space<vmem>>, vector<8x1xf32>
    tpu.vector_store %arg17[%c0_72, %c6], %199 {strides = array<i32>} : memref<8x128xf32, #tpu.memory_space<vmem>>, vector<8x1xf32>,
    return
  }
  func.func @transform_0(%arg0: i32, %arg1: memref<16xi32, #tpu.memory_space<smem>>) -> (i32, i32, i32) {
    %c0_i32 = arith.constant 0 : i32
    %c0_i32_0 = arith.constant 0 : i32
    %c0_i32_1 = arith.constant 0 : i32
    return %arg0, %c0_i32, %c0_i32_0 : i32, i32, i32
  }
  func.func @transform_1(%arg0: i32, %arg1: memref<16xi32, #tpu.memory_space<smem>>) -> (i32, i32) {
    %c0_i32 = arith.constant 0 : i32
    %c0_i32_0 = arith.constant 0 : i32
    %c0_i32_1 = arith.constant 0 : i32
    return %c0_i32, %c0_i32_0 : i32, i32
  }
  func.func @transform_2(%arg0: i32, %arg1: memref<16xi32, #tpu.memory_space<smem>>) -> (i32, i32) {
    %c0_i32 = arith.constant 0 : i32
    %c0_i32_0 = arith.constant 0 : i32
    %c0_i32_1 = arith.constant 0 : i32
    return %c0_i32, %c0_i32_0 : i32, i32
  }
  func.func @transform_3(%arg0: i32, %arg1: memref<16xi32, #tpu.memory_space<smem>>) -> (i32, i32) {
    %c0_i32 = arith.constant 0 : i32
    %c0_i32_0 = arith.constant 0 : i32
    %c0_i32_1 = arith.constant 0 : i32
    return %c0_i32, %c0_i32_0 : i32, i32
  }
  func.func @transform_4(%arg0: i32, %arg1: memref<16xi32, #tpu.memory_space<smem>>) -> (i32, i32) {
    %c0_i32 = arith.constant 0 : i32
    %c0_i32_0 = arith.constant 0 : i32
    %c0_i32_1 = arith.constant 0 : i32
    return %c0_i32, %c0_i32_0 : i32, i32
  }
  func.func @transform_5(%arg0: i32, %arg1: memref<16xi32, #tpu.memory_space<smem>>) -> (i32, i32) {
    %c0_i32 = arith.constant 0 : i32
    %c0_i32_0 = arith.constant 0 : i32
    %c0_i32_1 = arith.constant 0 : i32
    return %c0_i32, %c0_i32_0 : i32, i32
  }
  func.func @transform_6(%arg0: i32, %arg1: memref<16xi32, #tpu.memory_space<smem>>) -> (i32, i32) {
    %c0_i32 = arith.constant 0 : i32
    %c0_i32_0 = arith.constant 0 : i32
    %c0_i32_1 = arith.constant 0 : i32
    return %c0_i32, %c0_i32_0 : i32, i32
  }
  func.func @transform_7(%arg0: i32, %arg1: memref<16xi32, #tpu.memory_space<smem>>) -> (i32, i32) {
    %c0_i32 = arith.constant 0 : i32
    %c0_i32_0 = arith.constant 0 : i32
    %c0_i32_1 = arith.constant 0 : i32
    return %c0_i32, %c0_i32_0 : i32, i32
  }
  func.func @transform_8(%arg0: i32, %arg1: memref<16xi32, #tpu.memory_space<smem>>) -> (i32, i32) {
    %c0_i32 = arith.constant 0 : i32
    %c0_i32_0 = arith.constant 0 : i32
    %c0_i32_1 = arith.constant 0 : i32
    return %c0_i32, %c0_i32_0 : i32, i32
  }
  func.func @transform_9(%arg0: i32, %arg1: memref<16xi32, #tpu.memory_space<smem>>) -> (i32, i32) {
    %c0_i32 = arith.constant 0 : i32
    %c0_i32_0 = arith.constant 0 : i32
    %c0_i32_1 = arith.constant 0 : i32
    return %c0_i32, %c0_i32_0 : i32, i32
  }
  func.func @transform_10(%arg0: i32, %arg1: memref<16xi32, #tpu.memory_space<smem>>) -> (i32, i32) {
    %c0_i32 = arith.constant 0 : i32
    %c0_i32_0 = arith.constant 0 : i32
    %c0_i32_1 = arith.constant 0 : i32
    return %c0_i32, %c0_i32_0 : i32, i32
  }
  func.func @transform_11(%arg0: i32, %arg1: memref<16xi32, #tpu.memory_space<smem>>) -> (i32, i32) {
    %c0_i32 = arith.constant 0 : i32
    %c0_i32_0 = arith.constant 0 : i32
    %c0_i32_1 = arith.constant 0 : i32
    return %c0_i32, %c0_i32_0 : i32, i32
  }
  func.func @transform_12(%arg0: i32, %arg1: memref<16xi32, #tpu.memory_space<smem>>) -> (i32, i32) {
    %c0_i32 = arith.constant 0 : i32
    %c0_i32_0 = arith.constant 0 : i32
    %c0_i32_1 = arith.constant 0 : i32
    return %c0_i32, %c0_i32_0 : i32, i32
  }
  func.func @transform_13(%arg0: i32, %arg1: memref<16xi32, #tpu.memory_space<smem>>) -> (i32, i32) {
    %c0_i32 = arith.constant 0 : i32
    %c0_i32_0 = arith.constant 0 : i32
    %c0_i32_1 = arith.constant 0 : i32
    return %c0_i32, %c0_i32_0 : i32, i32
  }
  func.func @transform_14(%arg0: i32, %arg1: memref<16xi32, #tpu.memory_space<smem>>) -> (i32, i32) {
    %c0_i32 = arith.constant 0 : i32
    %c0_i32_0 = arith.constant 0 : i32
    %c0_i32_1 = arith.constant 0 : i32
    return %c0_i32, %c0_i32_0 : i32, i32
  }
  func.func @transform_15(%arg0: i32, %arg1: memref<16xi32, #tpu.memory_space<smem>>) -> (i32, i32) {
    %c0_i32 = arith.constant 0 : i32
    %c0_i32_0 = arith.constant 0 : i32
    return %arg0, %c0_i32 : i32, i32
  }
}

</mosaic_0001>

<llo_original>
// kernel: _enhanced_sentiment_head.1
$region0: #{_enhanced_sentiment_head.1}
  #allocation0 [shape = 'u32[]', space=smem, size = 0x4, offset = 0x4, fixed_abs, tag = 'smem constant byte address 0x4 - core index']
  #allocation1 [shape = 'u32[144,128]{1,0:T(1,128)}', space=vmem, size = 0x12000, scoped, tag = 'internal scratch']
  #allocation2 [shape = 's32[1]{0}', space=sflag, size = 0x4, scoped, tag = 'scoped memory for _enhanced_sentiment_head.1']
  #allocation3 [shape = 'u8[512]{0}', space=smem, size = 0x200, scoped, tag = 'prefetched SMEM operand 0']
  #allocation4 [shape = 'f32[1,1]{1,0:T(1,128)S(1)}', space=vmem, size = 0x200, scoped, tag = 'scoped memory for _enhanced_sentiment_head.1']
  %s0 = inlined_call_operand.vmem [shape: s32[16], index: 0, kind: input, shape index: {}]
  %s1 = inlined_call_operand.vmem [shape: bf16[16,8,64], index: 1, kind: input, shape index: {}]
  %s2 = inlined_call_operand.vmem [shape: bf16[64,512], index: 2, kind: input, shape index: {}]
  %s3 = inlined_call_operand.vmem [shape: f32[1,512], index: 3, kind: input, shape index: {}]
  %s4 = inlined_call_operand.vmem [shape: f32[1,512], index: 4, kind: input, shape index: {}]
  %s5 = inlined_call_operand.<no memory space> [shape: f32[1,1], index: 5, kind: input, shape index: {}]
  %s6 = inlined_call_operand.vmem [shape: bf16[64,512], index: 6, kind: input, shape index: {}]
  %s7 = inlined_call_operand.vmem [shape: f32[1,512], index: 7, kind: input, shape index: {}]
  %s8 = inlined_call_operand.vmem [shape: f32[1,512], index: 8, kind: input, shape index: {}]
  %s9 = inlined_call_operand.vmem [shape: f32[1,512], index: 9, kind: input, shape index: {}]
  %s10 = inlined_call_operand.vmem [shape: bf16[512,128], index: 10, kind: input, shape index: {}]
  %s11 = inlined_call_operand.vmem [shape: f32[1,128], index: 11, kind: input, shape index: {}]
  %s12 = inlined_call_operand.vmem [shape: f32[1,128], index: 12, kind: input, shape index: {}]
  %s13 = inlined_call_operand.vmem [shape: f32[1,128], index: 13, kind: input, shape index: {}]
  %s14 = inlined_call_operand.vmem [shape: bf16[128,3], index: 14, kind: input, shape index: {}]
  %s15 = inlined_call_operand.vmem [shape: f32[1,3], index: 15, kind: input, shape index: {}]
  %s16 = inlined_call_operand.vmem [shape: f32[16,128], index: 16, kind: output, shape index: {}]
  %s17 = sld [smem:[#allocation0]]
  $region93: #{_enhanced_sentiment_head.1} parent=0
    _
  %s19 = ssub.s32 1, %s17
  %s20 = scalar_select 0, %s19, %s17
  %s21 = sshll.u32 %s0, 4
  %s22 = int_to_ptr.vmem [resolvable:$true] %s21
  %24 = dma.vmem_to_smem %s22, 16, [#allocation3], [#allocation2]
  %v25 = vstv %s5
  %26 = vst [vmem:[#allocation4] sm:$0x1] %v25
  %27 = dma.done [#allocation2], 16
  %28 = sfence
  loop: start=0, step=1, limit=4
  $region2: #{_enhanced_sentiment_head.1} parent=0 // loop_pre_header
    _
  $region3: #{_enhanced_sentiment_head.1} parent=0 // loop_header
    %s30 = sphi 0, %s34
    %p31 = scmp.ge.s32.totalorder %s30, 4
    %s40 = sphi 0, %s42
    %s43 = sphi 0, %s40
    %s44 = sphi 0, %s43
    %s60 = sphi 0, %s44
    %s64 = sphi 0, %s64
    %s66 = sphi 0, %s64
    %s67 = sphi 0, %s66
    %s81 = sphi 0, %s67
    %s85 = sphi 0, %s85
    %s87 = sphi 0, %s85
    %s88 = sphi 0, %s87
    %s102 = sphi 0, %s88
    %s106 = sphi 0, %s106
    %s108 = sphi 0, %s106
    %s109 = sphi 0, %s108
    %s123 = sphi 0, %s109
    %s127 = sphi 0, %s127
    %s129 = sphi 0, %s127
    %s130 = sphi 0, %s129
    %s144 = sphi 0, %s130
    %s148 = sphi 0, %s148
    %s150 = sphi 0, %s148
    %s151 = sphi 0, %s150
    %s165 = sphi 0, %s151
    %s169 = sphi 0, %s169
    %s171 = sphi 0, %s169
    %s172 = sphi 0, %s171
    %s186 = sphi 0, %s172
    %s190 = sphi 0, %s190
    %s192 = sphi 0, %s190
    %s193 = sphi 0, %s192
    %s207 = sphi 0, %s193
    %s211 = sphi 0, %s211
    %s213 = sphi 0, %s211
    %s214 = sphi 0, %s213
    %s228 = sphi 0, %s214
    %s232 = sphi 0, %s232
    %s234 = sphi 0, %s232
    %s235 = sphi 0, %s234
    %s249 = sphi 0, %s235
    %s253 = sphi 0, %s253
    %s255 = sphi 0, %s253
    %s256 = sphi 0, %s255
    %s270 = sphi 0, %s256
    %s274 = sphi 0, %s274
    %s276 = sphi 0, %s274
    %s277 = sphi 0, %s276
    %s291 = sphi 0, %s277
    %s295 = sphi 0, %s295
    %s297 = sphi 0, %s295
    %s298 = sphi 0, %s297
    %s312 = sphi 0, %s298
    %s316 = sphi 0, %s316
    %s318 = sphi 0, %s316
    %s319 = sphi 0, %s318
    %s333 = sphi 0, %s319
    %s337 = sphi 0, %s337
    %s339 = sphi 0, %s337
    %s340 = sphi 0, %s339
    %s354 = sphi 0, %s340
    %s360 = sphi 0, %s362
    %s363 = sphi 0, %s360
    %s364 = sphi 0, %s363
    %s380 = sphi 0, %s364
  $region4: #{_enhanced_sentiment_head.1} parent=0 // loop_header_branch
    %33 = sbr.rel (%p31) target = $region8
  $region5: #{_enhanced_sentiment_head.1} parent=0 // loop_body
    %s35 = ssub.s32 %s30, 1
    %s36 = ssub.s32 %s30, 2
    %s37 = sadd.s32 %s30, 1
    %s38 = ssub.s32 %s30, %s37
    %p39 = scmp.eq.s32.totalorder %s38, 0
    %s41 = sadd.s32 %s40, 1
    %s42 = scalar_select %p39, %s40, %s41
    %p45 = pneg %p39
    %p46 = scmp.eq.s32.totalorder %s30, 1
    %p47 = por %p45, %p46
    %p48 = scmp.ne.s32.totalorder %s40, %s43
    %p49 = scmp.eq.s32.totalorder %s30, 0
    %p50 = por %p48, %p49
    %p51 = scmp.ne.s32.totalorder %s40, %s43
    %p52 = scmp.eq.s32.totalorder %s35, 1
    %p53 = por %p51, %p52
    %p54 = scmp.ne.s32.totalorder %s43, %s44
    %p55 = scmp.eq.s32.totalorder %s35, 0
    %p56 = por %p54, %p55
    %p57 = scmp.ne.s32.totalorder %s43, %s44
    %p58 = scmp.eq.s32.totalorder %s36, 1
    %p59 = por %p57, %p58
    %p61 = scmp.ne.s32.totalorder %s44, %s60
    %p62 = scmp.eq.s32.totalorder %s36, 0
    %p63 = por %p61, %p62
    %s65 = sadd.s32 %s64, 1
    %p68 = scmp.eq.s32.totalorder %s30, 1
    %p69 = scmp.ne.s32.totalorder %s64, %s66
    %p70 = scmp.eq.s32.totalorder %s30, 0
    %p71 = por %p69, %p70
    %p72 = scmp.ne.s32.totalorder %s64, %s66
    %p73 = scmp.eq.s32.totalorder %s35, 1
    %p74 = por %p72, %p73
    %p75 = scmp.ne.s32.totalorder %s66, %s67
    %p76 = scmp.eq.s32.totalorder %s35, 0
    %p77 = por %p75, %p76
    %p78 = scmp.ne.s32.totalorder %s66, %s67
    %p79 = scmp.eq.s32.totalorder %s36, 1
    %p80 = por %p78, %p79
    %p82 = scmp.ne.s32.totalorder %s67, %s81
    %p83 = scmp.eq.s32.totalorder %s36, 0
    %p84 = por %p82, %p83
    %s86 = sadd.s32 %s85, 1
    %p89 = scmp.eq.s32.totalorder %s30, 1
    %p90 = scmp.ne.s32.totalorder %s85, %s87
    %p91 = scmp.eq.s32.totalorder %s30, 0
    %p92 = por %p90, %p91
    %p93 = scmp.ne.s32.totalorder %s85, %s87
    %p94 = scmp.eq.s32.totalorder %s35, 1
    %p95 = por %p93, %p94
    %p96 = scmp.ne.s32.totalorder %s87, %s88
    %p97 = scmp.eq.s32.totalorder %s35, 0
    %p98 = por %p96, %p97
    %p99 = scmp.ne.s32.totalorder %s87, %s88
    %p100 = scmp.eq.s32.totalorder %s36, 1
    %p101 = por %p99, %p100
    %p103 = scmp.ne.s32.totalorder %s88, %s102
    %p104 = scmp.eq.s32.totalorder %s36, 0
    %p105 = por %p103, %p104
    %s107 = sadd.s32 %s106, 1
    %p110 = scmp.eq.s32.totalorder %s30, 1
    %p111 = scmp.ne.s32.totalorder %s106, %s108
    %p112 = scmp.eq.s32.totalorder %s30, 0
    %p113 = por %p111, %p112
    %p114 = scmp.ne.s32.totalorder %s106, %s108
    %p115 = scmp.eq.s32.totalorder %s35, 1
    %p116 = por %p114, %p115
    %p117 = scmp.ne.s32.totalorder %s108, %s109
    %p118 = scmp.eq.s32.totalorder %s35, 0
    %p119 = por %p117, %p118
    %p120 = scmp.ne.s32.totalorder %s108, %s109
    %p121 = scmp.eq.s32.totalorder %s36, 1
    %p122 = por %p120, %p121
    %p124 = scmp.ne.s32.totalorder %s109, %s123
    %p125 = scmp.eq.s32.totalorder %s36, 0
    %p126 = por %p124, %p125
    %s128 = sadd.s32 %s127, 1
    %p131 = scmp.eq.s32.totalorder %s30, 1
    %p132 = scmp.ne.s32.totalorder %s127, %s129
    %p133 = scmp.eq.s32.totalorder %s30, 0
    %p134 = por %p132, %p133
    %p135 = scmp.ne.s32.totalorder %s127, %s129
    %p136 = scmp.eq.s32.totalorder %s35, 1
    %p137 = por %p135, %p136
    %p138 = scmp.ne.s32.totalorder %s129, %s130
    %p139 = scmp.eq.s32.totalorder %s35, 0
    %p140 = por %p138, %p139
    %p141 = scmp.ne.s32.totalorder %s129, %s130
    %p142 = scmp.eq.s32.totalorder %s36, 1
    %p143 = por %p141, %p142
    %p145 = scmp.ne.s32.totalorder %s130, %s144
    %p146 = scmp.eq.s32.totalorder %s36, 0
    %p147 = por %p145, %p146
    %s149 = sadd.s32 %s148, 1
    %p152 = scmp.eq.s32.totalorder %s30, 1
    %p153 = scmp.ne.s32.totalorder %s148, %s150
    %p154 = scmp.eq.s32.totalorder %s30, 0
    %p155 = por %p153, %p154
    %p156 = scmp.ne.s32.totalorder %s148, %s150
    %p157 = scmp.eq.s32.totalorder %s35, 1
    %p158 = por %p156, %p157
    %p159 = scmp.ne.s32.totalorder %s150, %s151
    %p160 = scmp.eq.s32.totalorder %s35, 0
    %p161 = por %p159, %p160
    %p162 = scmp.ne.s32.totalorder %s150, %s151
    %p163 = scmp.eq.s32.totalorder %s36, 1
    %p164 = por %p162, %p163
    %p166 = scmp.ne.s32.totalorder %s151, %s165
    %p167 = scmp.eq.s32.totalorder %s36, 0
    %p168 = por %p166, %p167
    %s170 = sadd.s32 %s169, 1
    %p173 = scmp.eq.s32.totalorder %s30, 1
    %p174 = scmp.ne.s32.totalorder %s169, %s171
    %p175 = scmp.eq.s32.totalorder %s30, 0
    %p176 = por %p174, %p175
    %p177 = scmp.ne.s32.totalorder %s169, %s171
    %p178 = scmp.eq.s32.totalorder %s35, 1
    %p179 = por %p177, %p178
    %p180 = scmp.ne.s32.totalorder %s171, %s172
    %p181 = scmp.eq.s32.totalorder %s35, 0
    %p182 = por %p180, %p181
    %p183 = scmp.ne.s32.totalorder %s171, %s172
    %p184 = scmp.eq.s32.totalorder %s36, 1
    %p185 = por %p183, %p184
    %p187 = scmp.ne.s32.totalorder %s172, %s186
    %p188 = scmp.eq.s32.totalorder %s36, 0
    %p189 = por %p187, %p188
    %s191 = sadd.s32 %s190, 1
    %p194 = scmp.eq.s32.totalorder %s30, 1
    %p195 = scmp.ne.s32.totalorder %s190, %s192
    %p196 = scmp.eq.s32.totalorder %s30, 0
    %p197 = por %p195, %p196
    %p198 = scmp.ne.s32.totalorder %s190, %s192
    %p199 = scmp.eq.s32.totalorder %s35, 1
    %p200 = por %p198, %p199
    %p201 = scmp.ne.s32.totalorder %s192, %s193
    %p202 = scmp.eq.s32.totalorder %s35, 0
    %p203 = por %p201, %p202
    %p204 = scmp.ne.s32.totalorder %s192, %s193
    %p205 = scmp.eq.s32.totalorder %s36, 1
    %p206 = por %p204, %p205
    %p208 = scmp.ne.s32.totalorder %s193, %s207
    %p209 = scmp.eq.s32.totalorder %s36, 0
    %p210 = por %p208, %p209
    %s212 = sadd.s32 %s211, 1
    %p215 = scmp.eq.s32.totalorder %s30, 1
    %p216 = scmp.ne.s32.totalorder %s211, %s213
    %p217 = scmp.eq.s32.totalorder %s30, 0
    %p218 = por %p216, %p217
    %p219 = scmp.ne.s32.totalorder %s211, %s213
    %p220 = scmp.eq.s32.totalorder %s35, 1
    %p221 = por %p219, %p220
    %p222 = scmp.ne.s32.totalorder %s213, %s214
    %p223 = scmp.eq.s32.totalorder %s35, 0
    %p224 = por %p222, %p223
    %p225 = scmp.ne.s32.totalorder %s213, %s214
    %p226 = scmp.eq.s32.totalorder %s36, 1
    %p227 = por %p225, %p226
    %p229 = scmp.ne.s32.totalorder %s214, %s228
    %p230 = scmp.eq.s32.totalorder %s36, 0
    %p231 = por %p229, %p230
    %s233 = sadd.s32 %s232, 1
    %p236 = scmp.eq.s32.totalorder %s30, 1
    %p237 = scmp.ne.s32.totalorder %s232, %s234
    %p238 = scmp.eq.s32.totalorder %s30, 0
    %p239 = por %p237, %p238
    %p240 = scmp.ne.s32.totalorder %s232, %s234
    %p241 = scmp.eq.s32.totalorder %s35, 1
    %p242 = por %p240, %p241
    %p243 = scmp.ne.s32.totalorder %s234, %s235
    %p244 = scmp.eq.s32.totalorder %s35, 0
    %p245 = por %p243, %p244
    %p246 = scmp.ne.s32.totalorder %s234, %s235
    %p247 = scmp.eq.s32.totalorder %s36, 1
    %p248 = por %p246, %p247
    %p250 = scmp.ne.s32.totalorder %s235, %s249
    %p251 = scmp.eq.s32.totalorder %s36, 0
    %p252 = por %p250, %p251
    %s254 = sadd.s32 %s253, 1
    %p257 = scmp.eq.s32.totalorder %s30, 1
    %p258 = scmp.ne.s32.totalorder %s253, %s255
    %p259 = scmp.eq.s32.totalorder %s30, 0
    %p260 = por %p258, %p259
    %p261 = scmp.ne.s32.totalorder %s253, %s255
    %p262 = scmp.eq.s32.totalorder %s35, 1
    %p263 = por %p261, %p262
    %p264 = scmp.ne.s32.totalorder %s255, %s256
    %p265 = scmp.eq.s32.totalorder %s35, 0
    %p266 = por %p264, %p265
    %p267 = scmp.ne.s32.totalorder %s255, %s256
    %p268 = scmp.eq.s32.totalorder %s36, 1
    %p269 = por %p267, %p268
    %p271 = scmp.ne.s32.totalorder %s256, %s270
    %p272 = scmp.eq.s32.totalorder %s36, 0
    %p273 = por %p271, %p272
    %s275 = sadd.s32 %s274, 1
    %p278 = scmp.eq.s32.totalorder %s30, 1
    %p279 = scmp.ne.s32.totalorder %s274, %s276
    %p280 = scmp.eq.s32.totalorder %s30, 0
    %p281 = por %p279, %p280
    %p282 = scmp.ne.s32.totalorder %s274, %s276
    %p283 = scmp.eq.s32.totalorder %s35, 1
    %p284 = por %p282, %p283
    %p285 = scmp.ne.s32.totalorder %s276, %s277
    %p286 = scmp.eq.s32.totalorder %s35, 0
    %p287 = por %p285, %p286
    %p288 = scmp.ne.s32.totalorder %s276, %s277
    %p289 = scmp.eq.s32.totalorder %s36, 1
    %p290 = por %p288, %p289
    %p292 = scmp.ne.s32.totalorder %s277, %s291
    %p293 = scmp.eq.s32.totalorder %s36, 0
    %p294 = por %p292, %p293
    %s296 = sadd.s32 %s295, 1
    %p299 = scmp.eq.s32.totalorder %s30, 1
    %p300 = scmp.ne.s32.totalorder %s295, %s297
    %p301 = scmp.eq.s32.totalorder %s30, 0
    %p302 = por %p300, %p301
    %p303 = scmp.ne.s32.totalorder %s295, %s297
    %p304 = scmp.eq.s32.totalorder %s35, 1
    %p305 = por %p303, %p304
    %p306 = scmp.ne.s32.totalorder %s297, %s298
    %p307 = scmp.eq.s32.totalorder %s35, 0
    %p308 = por %p306, %p307
    %p309 = scmp.ne.s32.totalorder %s297, %s298
    %p310 = scmp.eq.s32.totalorder %s36, 1
    %p311 = por %p309, %p310
    %p313 = scmp.ne.s32.totalorder %s298, %s312
    %p314 = scmp.eq.s32.totalorder %s36, 0
    %p315 = por %p313, %p314
    %s317 = sadd.s32 %s316, 1
    %p320 = scmp.eq.s32.totalorder %s30, 1
    %p321 = scmp.ne.s32.totalorder %s316, %s318
    %p322 = scmp.eq.s32.totalorder %s30, 0
    %p323 = por %p321, %p322
    %p324 = scmp.ne.s32.totalorder %s316, %s318
    %p325 = scmp.eq.s32.totalorder %s35, 1
    %p326 = por %p324, %p325
    %p327 = scmp.ne.s32.totalorder %s318, %s319
    %p328 = scmp.eq.s32.totalorder %s35, 0
    %p329 = por %p327, %p328
    %p330 = scmp.ne.s32.totalorder %s318, %s319
    %p331 = scmp.eq.s32.totalorder %s36, 1
    %p332 = por %p330, %p331
    %p334 = scmp.ne.s32.totalorder %s319, %s333
    %p335 = scmp.eq.s32.totalorder %s36, 0
    %p336 = por %p334, %p335
    %s338 = sadd.s32 %s337, 1
    %p341 = scmp.eq.s32.totalorder %s30, 1
    %p342 = scmp.ne.s32.totalorder %s337, %s339
    %p343 = scmp.eq.s32.totalorder %s30, 0
    %p344 = por %p342, %p343
    %p345 = scmp.ne.s32.totalorder %s337, %s339
    %p346 = scmp.eq.s32.totalorder %s35, 1
    %p347 = por %p345, %p346
    %p348 = scmp.ne.s32.totalorder %s339, %s340
    %p349 = scmp.eq.s32.totalorder %s35, 0
    %p350 = por %p348, %p349
    %p351 = scmp.ne.s32.totalorder %s339, %s340
    %p352 = scmp.eq.s32.totalorder %s36, 1
    %p353 = por %p351, %p352
    %p355 = scmp.ne.s32.totalorder %s340, %s354
    %p356 = scmp.eq.s32.totalorder %s36, 0
    %p357 = por %p355, %p356
    %s358 = ssub.s32 %s30, %s37
    %p359 = scmp.eq.s32.totalorder %s358, 0
    %s361 = sadd.s32 %s360, 1
    %s362 = scalar_select %p359, %s360, %s361
    %p365 = pneg %p359
    %p366 = scmp.eq.s32.totalorder %s30, 1
    %p367 = por %p365, %p366
    %p368 = scmp.ne.s32.totalorder %s360, %s363
    %p369 = scmp.eq.s32.totalorder %s30, 0
    %p370 = por %p368, %p369
    %p371 = scmp.ne.s32.totalorder %s360, %s363
    %p372 = scmp.eq.s32.totalorder %s35, 1
    %p373 = por %p371, %p372
    %p374 = scmp.ne.s32.totalorder %s363, %s364
    %p375 = scmp.eq.s32.totalorder %s35, 0
    %p376 = por %p374, %p375
    %p377 = scmp.ne.s32.totalorder %s363, %s364
    %p378 = scmp.eq.s32.totalorder %s36, 1
    %p379 = por %p377, %p378
    %p381 = scmp.ne.s32.totalorder %s364, %s380
    %p382 = scmp.eq.s32.totalorder %s36, 0
    %p383 = por %p381, %p382
    %p384 = scmp.le.s32.totalorder 1, %s30
    %p385 = scmp.lt.s32.totalorder %s30, 3
    %p386 = pnand %p384, %p385
    %p387 = pneg %p386
    // Predicated region
    $region9: #{_enhanced_sentiment_head.1} parent=5 // pred_check
      _
    $region10: #{_enhanced_sentiment_head.1} parent=5 // pred_check_branch
      %389 = sbr.rel (%p386) target = $region12
    $region11: #{_enhanced_sentiment_head.1} parent=5 // pred_region
      %s390 = ssub.s32 %s30, 1
      // Predicated region
      $region13: #{_enhanced_sentiment_head.1} parent=11 // pred_check
        %p391 = pneg %p77
      $region14: #{_enhanced_sentiment_head.1} parent=11 // pred_check_branch
        %393 = sbr.rel (%p391) target = $region16
      $region15: #{_enhanced_sentiment_head.1} parent=11 // pred_region
        _
      $region16: #{_enhanced_sentiment_head.1} parent=11 // pred_fallthru
        _
      // Predicated region
      $region17: #{_enhanced_sentiment_head.1} parent=11 // pred_check
        %p394 = pneg %p98
      $region18: #{_enhanced_sentiment_head.1} parent=11 // pred_check_branch
        %396 = sbr.rel (%p394) target = $region20
      $region19: #{_enhanced_sentiment_head.1} parent=11 // pred_region
        _
      $region20: #{_enhanced_sentiment_head.1} parent=11 // pred_fallthru
        _
      // Predicated region
      $region21: #{_enhanced_sentiment_head.1} parent=11 // pred_check
        %p397 = pneg %p119
      $region22: #{_enhanced_sentiment_head.1} parent=11 // pred_check_branch
        %399 = sbr.rel (%p397) target = $region24
      $region23: #{_enhanced_sentiment_head.1} parent=11 // pred_region
        _
      $region24: #{_enhanced_sentiment_head.1} parent=11 // pred_fallthru
        _
      // Predicated region
      $region25: #{_enhanced_sentiment_head.1} parent=11 // pred_check
        %p400 = pneg %p140
      $region26: #{_enhanced_sentiment_head.1} parent=11 // pred_check_branch
        %402 = sbr.rel (%p400) target = $region28
      $region27: #{_enhanced_sentiment_head.1} parent=11 // pred_region
        _
      $region28: #{_enhanced_sentiment_head.1} parent=11 // pred_fallthru
        _
      // Predicated region
      $region29: #{_enhanced_sentiment_head.1} parent=11 // pred_check
        %p403 = pneg %p161
      $region30: #{_enhanced_sentiment_head.1} parent=11 // pred_check_branch
        %405 = sbr.rel (%p403) target = $region32
      $region31: #{_enhanced_sentiment_head.1} parent=11 // pred_region
        _
      $region32: #{_enhanced_sentiment_head.1} parent=11 // pred_fallthru
        _
      // Predicated region
      $region33: #{_enhanced_sentiment_head.1} parent=11 // pred_check
        %p406 = pneg %p182
      $region34: #{_enhanced_sentiment_head.1} parent=11 // pred_check_branch
        %408 = sbr.rel (%p406) target = $region36
      $region35: #{_enhanced_sentiment_head.1} parent=11 // pred_region
        _
      $region36: #{_enhanced_sentiment_head.1} parent=11 // pred_fallthru
        _
      // Predicated region
      $region37: #{_enhanced_sentiment_head.1} parent=11 // pred_check
        %p409 = pneg %p203
      $region38: #{_enhanced_sentiment_head.1} parent=11 // pred_check_branch
        %411 = sbr.rel (%p409) target = $region40
      $region39: #{_enhanced_sentiment_head.1} parent=11 // pred_region
        _
      $region40: #{_enhanced_sentiment_head.1} parent=11 // pred_fallthru
        _
      // Predicated region
      $region41: #{_enhanced_sentiment_head.1} parent=11 // pred_check
        %p412 = pneg %p224
      $region42: #{_enhanced_sentiment_head.1} parent=11 // pred_check_branch
        %414 = sbr.rel (%p412) target = $region44
      $region43: #{_enhanced_sentiment_head.1} parent=11 // pred_region
        _
      $region44: #{_enhanced_sentiment_head.1} parent=11 // pred_fallthru
        _
      // Predicated region
      $region45: #{_enhanced_sentiment_head.1} parent=11 // pred_check
        %p415 = pneg %p245
      $region46: #{_enhanced_sentiment_head.1} parent=11 // pred_check_branch
        %417 = sbr.rel (%p415) target = $region48
      $region47: #{_enhanced_sentiment_head.1} parent=11 // pred_region
        _
      $region48: #{_enhanced_sentiment_head.1} parent=11 // pred_fallthru
        _
      // Predicated region
      $region49: #{_enhanced_sentiment_head.1} parent=11 // pred_check
        %p418 = pneg %p266
      $region50: #{_enhanced_sentiment_head.1} parent=11 // pred_check_branch
        %420 = sbr.rel (%p418) target = $region52
      $region51: #{_enhanced_sentiment_head.1} parent=11 // pred_region
        _
      $region52: #{_enhanced_sentiment_head.1} parent=11 // pred_fallthru
        _
      // Predicated region
      $region53: #{_enhanced_sentiment_head.1} parent=11 // pred_check
        %p421 = pneg %p287
      $region54: #{_enhanced_sentiment_head.1} parent=11 // pred_check_branch
        %423 = sbr.rel (%p421) target = $region56
      $region55: #{_enhanced_sentiment_head.1} parent=11 // pred_region
        _
      $region56: #{_enhanced_sentiment_head.1} parent=11 // pred_fallthru
        _
      // Predicated region
      $region57: #{_enhanced_sentiment_head.1} parent=11 // pred_check
        %p424 = pneg %p308
      $region58: #{_enhanced_sentiment_head.1} parent=11 // pred_check_branch
        %426 = sbr.rel (%p424) target = $region60
      $region59: #{_enhanced_sentiment_head.1} parent=11 // pred_region
        _
      $region60: #{_enhanced_sentiment_head.1} parent=11 // pred_fallthru
        _
      // Predicated region
      $region61: #{_enhanced_sentiment_head.1} parent=11 // pred_check
        %p427 = pneg %p329
      $region62: #{_enhanced_sentiment_head.1} parent=11 // pred_check_branch
        %429 = sbr.rel (%p427) target = $region64
      $region63: #{_enhanced_sentiment_head.1} parent=11 // pred_region
        _
      $region64: #{_enhanced_sentiment_head.1} parent=11 // pred_fallthru
        _
      // Predicated region
      $region65: #{_enhanced_sentiment_head.1} parent=11 // pred_check
        %p430 = pneg %p350
      $region66: #{_enhanced_sentiment_head.1} parent=11 // pred_check_branch
        %432 = sbr.rel (%p430) target = $region68
      $region67: #{_enhanced_sentiment_head.1} parent=11 // pred_region
        _
      $region68: #{_enhanced_sentiment_head.1} parent=11 // pred_fallthru
        _
    $region12: #{_enhanced_sentiment_head.1} parent=5 // pred_fallthru
      _
    %p433 = scmp.lt.s32.totalorder %s30, 2
    // Predicated region
    $region69: #{_enhanced_sentiment_head.1} parent=5 // pred_check
      %p434 = pneg %p433
    $region70: #{_enhanced_sentiment_head.1} parent=5 // pred_check_branch
      %436 = sbr.rel (%p434) target = $region72
    $region71: #{_enhanced_sentiment_head.1} parent=5 // pred_region
      // Predicated region
      $region73: #{_enhanced_sentiment_head.1} parent=71 // pred_check
        %p437 = pneg %p50
      $region74: #{_enhanced_sentiment_head.1} parent=71 // pred_check_branch
        %439 = sbr.rel (%p437) target = $region76
      $region75: #{_enhanced_sentiment_head.1} parent=71 // pred_region
        %s440 = smul.u32 8, %s30
        %p441 = scmp.lt.s32.totalorder %s440, 15
        %s442 = scalar_select %p441, %s440, 15
        %s443 = smul.addr %s442, 4
        %s444 = scalar_lea.vmem %s1, %s443
        %s445 = smul.u32 8, %s30
      $region76: #{_enhanced_sentiment_head.1} parent=71 // pred_fallthru
        _
    $region72: #{_enhanced_sentiment_head.1} parent=5 // pred_fallthru
      _
    %p446 = scmp.le.s32.totalorder 1, %s30
    %p447 = scmp.lt.s32.totalorder %s30, 3
    %p448 = pnand %p446, %p447
    %p449 = pneg %p448
    // Predicated region
    $region77: #{_enhanced_sentiment_head.1} parent=5 // pred_check
      _
    $region78: #{_enhanced_sentiment_head.1} parent=5 // pred_check_branch
      %451 = sbr.rel (%p448) target = $region80
    $region79: #{_enhanced_sentiment_head.1} parent=5 // pred_region
      %s452 = ssub.s32 %s30, 1
      %s453 = smul.u32 8, %s35
      %p454 = scmp.lt.s32.totalorder %s453, 15
      %s455 = scalar_select %p454, %s453, 15
      %s456 = smul.addr %s455, 4
      %s457 = scalar_lea.vmem %s1, %s456
      %p458 = pneg %p56
      %p459 = pneg %p53
      %p460 = pneg %p77
      %p461 = pneg %p74
      %p462 = pneg %p98
      %p463 = pneg %p95
      %p464 = pneg %p119
      %p465 = pneg %p116
      %p466 = pneg %p140
      %p467 = pneg %p137
      %p468 = pneg %p161
      %p469 = pneg %p158
      %p470 = pneg %p182
      %p471 = pneg %p179
      %p472 = pneg %p203
      %p473 = pneg %p200
      %p474 = pneg %p224
      %p475 = pneg %p221
      %p476 = pneg %p245
      %p477 = pneg %p242
      %p478 = pneg %p266
      %p479 = pneg %p263
      %p480 = pneg %p287
      %p481 = pneg %p284
      %p482 = pneg %p308
      %p483 = pneg %p305
      %p484 = pneg %p329
      %p485 = pneg %p326
      %p486 = pneg %p350
      %p487 = pneg %p347
      %p488 = pneg %p376
      %p489 = pneg %p373
      %p490 = scmp.lt.s32.totalorder %s35, 1
      %s491 = scalar_select %p490, %s35, 1
      %s492 = smul.addr %s491, 8
      %s493 = scalar_lea.vmem %s16, %s492
      %s494 = smul.u32 8, %s35
      %p495 = scmp.lt.s32.totalorder %s494, 15
      %s496 = scalar_select %p495, %s494, 15
      %s497 = smul.addr %s496, 4
      %s498 = scalar_lea.vmem %s1, %s497
      %s499 = smul.u32 8, %s35
      %p500 = scmp.lt.s32.totalorder %s35, 1
      %s501 = scalar_select %p500, %s35, 1
      %s502 = smul.addr %s501, 8
      %s503 = scalar_lea.vmem %s16, %s502
      %v505 = vld [vmem:[%s498] sm:$0xf]
      %v506 = vld [vmem:[%s498 + $0x4] sm:$0xf]
      %v507 = vld [vmem:[%s498 + $0x8] sm:$0xf]
      %v508 = vld [vmem:[%s498 + $0xc] sm:$0xf]
      %v509 = vld [vmem:[%s498 + $0x10] sm:$0xf]
      %v510 = vld [vmem:[%s498 + $0x14] sm:$0xf]
      %v511 = vld [vmem:[%s498 + $0x18] sm:$0xf]
      %v512 = vld [vmem:[%s498 + $0x1c] sm:$0xf]
      %v513 = vld [vmem:[%s2] sm:$0xff]
      %v514 = vld [vmem:[%s2 + $0x8] sm:$0xff]
      %v515 = vld [vmem:[%s2 + $0x10] sm:$0xff]
      %v516 = vld [vmem:[%s2 + $0x18] sm:$0xff]
      %v517 = vld [vmem:[%s2 + $0x20] sm:$0xff]
      %v518 = vld [vmem:[%s2 + $0x28] sm:$0xff]
      %v519 = vld [vmem:[%s2 + $0x30] sm:$0xff]
      %v520 = vld [vmem:[%s2 + $0x38] sm:$0xff]
      %v521 = vld [vmem:[%s2 + $0x40] sm:$0xff]
      %v522 = vld [vmem:[%s2 + $0x48] sm:$0xff]
      %v523 = vld [vmem:[%s2 + $0x50] sm:$0xff]
      %v524 = vld [vmem:[%s2 + $0x58] sm:$0xff]
      %v525 = vld [vmem:[%s2 + $0x60] sm:$0xff]
      %v526 = vld [vmem:[%s2 + $0x68] sm:$0xff]
      %v527 = vld [vmem:[%s2 + $0x70] sm:$0xff]
      %v528 = vld [vmem:[%s2 + $0x78] sm:$0xff]
      %v529 = vld [vmem:[%s3] sm:$0xf]
      %v531 = vlaneseq
      %v532 = vshrl.u32 %v531, 7
      %v533 = vsub.s32 0, %v532
      %v534 = vrot.slane %v529, %v533
      %v535 = vlaneseq
      %v536 = vshrl.u32 %v535, 7
      %v537 = vsub.s32 1, %v536
      %v538 = vrot.slane %v529, %v537
      %v539 = vlaneseq
      %v540 = vshrl.u32 %v539, 7
      %v541 = vsub.s32 2, %v540
      %v542 = vrot.slane %v529, %v541
      %v543 = vlaneseq
      %v544 = vshrl.u32 %v543, 7
      %v545 = vsub.s32 3, %v544
      %v546 = vrot.slane %v529, %v545
      %v559 = vunpack.c.l.b16 %v505
      %v560 = vunpack.c.l.b16 %v506
      %v561 = vunpack.c.l.b16 %v507
      %v562 = vunpack.c.l.b16 %v508
      %v563 = vunpack.c.l.b16 %v509
      %v564 = vunpack.c.l.b16 %v510
      %v565 = vunpack.c.l.b16 %v511
      %v566 = vunpack.c.l.b16 %v512
      %v567 = vpack.c.b16 %v560, %v559
      %v568 = vpack.c.b16 %v562, %v561
      %v569 = vpack.c.b16 %v564, %v563
      %v570 = vpack.c.b16 %v566, %v565
      %v587 = vunpack.c.l.b16 %v513
      %v588 = vunpack.c.h.b16 %v513
      %v589 = vunpack.c.l.b16 %v514
      %v590 = vunpack.c.h.b16 %v514
      %v591 = vunpack.c.l.b16 %v515
      %v592 = vunpack.c.h.b16 %v515
      %v593 = vunpack.c.l.b16 %v516
      %v594 = vunpack.c.h.b16 %v516
      %v595 = vunpack.c.l.b16 %v517
      %v596 = vunpack.c.h.b16 %v517
      %v597 = vunpack.c.l.b16 %v518
      %v598 = vunpack.c.h.b16 %v518
      %v599 = vunpack.c.l.b16 %v519
      %v600 = vunpack.c.h.b16 %v519
      %v601 = vunpack.c.l.b16 %v520
      %v602 = vunpack.c.h.b16 %v520
      %v603 = vunpack.c.l.b16 %v521
      %v604 = vunpack.c.h.b16 %v521
      %v605 = vunpack.c.l.b16 %v522
      %v606 = vunpack.c.h.b16 %v522
      %v607 = vunpack.c.l.b16 %v523
      %v608 = vunpack.c.h.b16 %v523
      %v609 = vunpack.c.l.b16 %v524
      %v610 = vunpack.c.h.b16 %v524
      %v611 = vunpack.c.l.b16 %v525
      %v612 = vunpack.c.h.b16 %v525
      %v613 = vunpack.c.l.b16 %v526
      %v614 = vunpack.c.h.b16 %v526
      %v615 = vunpack.c.l.b16 %v527
      %v616 = vunpack.c.h.b16 %v527
      %v617 = vunpack.c.l.b16 %v528
      %v618 = vunpack.c.h.b16 %v528
      %v619 = vpack.c.b16 %v591, %v587
      %v620 = vpack.c.b16 %v592, %v588
      %v621 = vpack.c.b16 %v593, %v589
      %v622 = vpack.c.b16 %v594, %v590
      %v623 = vpack.c.b16 %v599, %v595
      %v624 = vpack.c.b16 %v600, %v596
      %v625 = vpack.c.b16 %v601, %v597
      %v626 = vpack.c.b16 %v602, %v598
      %v627 = vpack.c.b16 %v607, %v603
      %v628 = vpack.c.b16 %v608, %v604
      %v629 = vpack.c.b16 %v609, %v605
      %v630 = vpack.c.b16 %v610, %v606
      %v631 = vpack.c.b16 %v615, %v611
      %v632 = vpack.c.b16 %v616, %v612
      %v633 = vpack.c.b16 %v617, %v613
      %v634 = vpack.c.b16 %v618, %v614
      %vm651 = vcmask 523264
      %v653 = vsel %vm651, %v567, 0
      %v656 = vsel %vm651, %v568, 0
      %v659 = vsel %vm651, %v569, 0
      %v662 = vsel %vm651, %v570, 0
      %664 = vmatprep.subr.bf16.mxu0 0
      %665 = vmatpush1.bf16.msra.mxu0 0
      %666 = vmatprep.subr.bf16.mxu0 0
      %667 = vmatpush1.bf16.msra.mxu0 0
      %668 = vmatprep.subr.bf16.mxu0 0
      %669 = vmatpush1.bf16.msra.mxu0 0
      %670 = vmatprep.subr.bf16.mxu0 0
      %671 = vmatpush1.bf16.msra.mxu0 0
      %672 = vmatprep.subr.bf16.mxu0 %v632
      %673 = vmatpush1.bf16.msra.mxu0 %v631
      %674 = vmatprep.subr.bf16.mxu0 %v628
      %675 = vmatpush1.bf16.msra.mxu0 %v627
      %676 = vmatprep.subr.bf16.mxu0 %v624
      %677 = vmatpush1.bf16.msra.mxu0 %v623
      %678 = vmatprep.subr.bf16.mxu0 %v620
      %679 = vmatpush1.bf16.msra.mxu0 %v619
      %680 = vmatprep.subr.bf16.mxu0 0
      %681 = vmatpush2.bf16.msra.mxu0 0
      %682 = vmatprep.subr.bf16.mxu0 0
      %683 = vmatpush2.bf16.msra.mxu0 0
      %684 = vmatprep.subr.bf16.mxu0 0
      %685 = vmatpush2.bf16.msra.mxu0 0
      %686 = vmatprep.subr.bf16.mxu0 0
      %687 = vmatpush2.bf16.msra.mxu0 0
      %688 = vmatprep.subr.bf16.mxu0 0
      %689 = vmatpush2.bf16.msra.mxu0 0
      %690 = vmatprep.subr.bf16.mxu0 0
      %691 = vmatpush2.bf16.msra.mxu0 0
      %692 = vmatprep.subr.bf16.mxu0 0
      %693 = vmatpush2.bf16.msra.mxu0 0
      %694 = vmatprep.subr.bf16.mxu0 0
      %695 = vmatpush2.bf16.msra.mxu0 0
      %696 = vmatprep.mubr.bf16.mxu0 0
      %697 = vmatmul.mubr.bf16.gmra.mxu0 %v653
      %v698 = vpop.f32.mrf.mxu0
      %v699 = vadd.f32 %v534, %v698
      %v700 = vpop.f32.mrf.mxu0
      %v701 = vadd.f32 %v538, %v700
      %v702 = vpop.f32.mrf.mxu0
      %v703 = vadd.f32 %v534, %v702
      %v704 = vpop.f32.mrf.mxu0
      %v705 = vadd.f32 %v538, %v704
      %706 = vmatprep.mubr.bf16.mxu0 0
      %707 = vmatmul.mubr.bf16.gmra.mxu0 %v656
      %v708 = vpop.f32.mrf.mxu0
      %v709 = vadd.f32 %v534, %v708
      %v710 = vpop.f32.mrf.mxu0
      %v711 = vadd.f32 %v538, %v710
      %v712 = vpop.f32.mrf.mxu0
      %v713 = vadd.f32 %v534, %v712
      %v714 = vpop.f32.mrf.mxu0
      %v715 = vadd.f32 %v538, %v714
      %716 = vmatprep.mubr.bf16.mxu0 0
      %717 = vmatmul.mubr.bf16.gmra.mxu0 %v659
      %v718 = vpop.f32.mrf.mxu0
      %v719 = vadd.f32 %v534, %v718
      %v720 = vpop.f32.mrf.mxu0
      %v721 = vadd.f32 %v538, %v720
      %v722 = vpop.f32.mrf.mxu0
      %v723 = vadd.f32 %v534, %v722
      %v724 = vpop.f32.mrf.mxu0
      %v725 = vadd.f32 %v538, %v724
      %726 = vmatprep.mubr.bf16.mxu0 0
      %727 = vmatmul.mubr.bf16.gmra.mxu0 %v662
      %v728 = vpop.f32.mrf.mxu0
      %v729 = vadd.f32 %v534, %v728
      %v730 = vpop.f32.mrf.mxu0
      %v731 = vadd.f32 %v538, %v730
      %v732 = vpop.f32.mrf.mxu0
      %v733 = vadd.f32 %v534, %v732
      %v734 = vpop.f32.mrf.mxu0
      %v735 = vadd.f32 %v538, %v734
      %736 = vdwg.mxu0
      %737 = vmatprep.subr.bf16.mxu0 0
      %738 = vmatpush1.bf16.msra.mxu0 0
      %739 = vmatprep.subr.bf16.mxu0 0
      %740 = vmatpush1.bf16.msra.mxu0 0
      %741 = vmatprep.subr.bf16.mxu0 0
      %742 = vmatpush1.bf16.msra.mxu0 0
      %743 = vmatprep.subr.bf16.mxu0 0
      %744 = vmatpush1.bf16.msra.mxu0 0
      %745 = vmatprep.subr.bf16.mxu0 %v634
      %746 = vmatpush1.bf16.msra.mxu0 %v633
      %747 = vmatprep.subr.bf16.mxu0 %v630
      %748 = vmatpush1.bf16.msra.mxu0 %v629
      %749 = vmatprep.subr.bf16.mxu0 %v626
      %750 = vmatpush1.bf16.msra.mxu0 %v625
      %751 = vmatprep.subr.bf16.mxu0 %v622
      %752 = vmatpush1.bf16.msra.mxu0 %v621
      %753 = vmatprep.subr.bf16.mxu0 0
      %754 = vmatpush2.bf16.msra.mxu0 0
      %755 = vmatprep.subr.bf16.mxu0 0
      %756 = vmatpush2.bf16.msra.mxu0 0
      %757 = vmatprep.subr.bf16.mxu0 0
      %758 = vmatpush2.bf16.msra.mxu0 0
      %759 = vmatprep.subr.bf16.mxu0 0
      %760 = vmatpush2.bf16.msra.mxu0 0
      %761 = vmatprep.subr.bf16.mxu0 0
      %762 = vmatpush2.bf16.msra.mxu0 0
      %763 = vmatprep.subr.bf16.mxu0 0
      %764 = vmatpush2.bf16.msra.mxu0 0
      %765 = vmatprep.subr.bf16.mxu0 0
      %766 = vmatpush2.bf16.msra.mxu0 0
      %767 = vmatprep.subr.bf16.mxu0 0
      %768 = vmatpush2.bf16.msra.mxu0 0
      %769 = vmatprep.mubr.bf16.mxu0 0
      %770 = vmatmul.mubr.bf16.gmra.mxu0 %v653
      %v771 = vpop.f32.mrf.mxu0
      %v772 = vadd.f32 %v542, %v771
      %v773 = vpop.f32.mrf.mxu0
      %v774 = vadd.f32 %v546, %v773
      %v775 = vpop.f32.mrf.mxu0
      %v776 = vadd.f32 %v542, %v775
      %v777 = vpop.f32.mrf.mxu0
      %v778 = vadd.f32 %v546, %v777
      %779 = vmatprep.mubr.bf16.mxu0 0
      %780 = vmatmul.mubr.bf16.gmra.mxu0 %v656
      %v781 = vpop.f32.mrf.mxu0
      %v782 = vadd.f32 %v542, %v781
      %v783 = vpop.f32.mrf.mxu0
      %v784 = vadd.f32 %v546, %v783
      %v785 = vpop.f32.mrf.mxu0
      %v786 = vadd.f32 %v542, %v785
      %v787 = vpop.f32.mrf.mxu0
      %v788 = vadd.f32 %v546, %v787
      %789 = vmatprep.mubr.bf16.mxu0 0
      %790 = vmatmul.mubr.bf16.gmra.mxu0 %v659
      %v791 = vpop.f32.mrf.mxu0
      %v792 = vadd.f32 %v542, %v791
      %v793 = vpop.f32.mrf.mxu0
      %v794 = vadd.f32 %v546, %v793
      %v795 = vpop.f32.mrf.mxu0
      %v796 = vadd.f32 %v542, %v795
      %v797 = vpop.f32.mrf.mxu0
      %v798 = vadd.f32 %v546, %v797
      %799 = vmatprep.mubr.bf16.mxu0 0
      %800 = vmatmul.mubr.bf16.gmra.mxu0 %v662
      %v801 = vpop.f32.mrf.mxu0
      %v802 = vadd.f32 %v542, %v801
      %v803 = vpop.f32.mrf.mxu0
      %v804 = vadd.f32 %v546, %v803
      %v805 = vpop.f32.mrf.mxu0
      %v806 = vadd.f32 %v542, %v805
      %v807 = vpop.f32.mrf.mxu0
      %v808 = vadd.f32 %v546, %v807
      %809 = vdwg.mxu0
      %v810 = vtanh.pop %v699
      %v811 = vtanh.pop %v701
      %v812 = vtanh.pop %v772
      %v813 = vtanh.pop %v774
      %v814 = vtanh.pop %v703
      %v815 = vtanh.pop %v705
      %v816 = vtanh.pop %v776
      %v817 = vtanh.pop %v778
      %v818 = vtanh.pop %v709
      %v819 = vtanh.pop %v711
      %v820 = vtanh.pop %v782
      %v821 = vtanh.pop %v784
      %v822 = vtanh.pop %v713
      %v823 = vtanh.pop %v715
      %v824 = vtanh.pop %v786
      %v825 = vtanh.pop %v788
      %v826 = vtanh.pop %v719
      %v827 = vtanh.pop %v721
      %v828 = vtanh.pop %v792
      %v829 = vtanh.pop %v794
      %v830 = vtanh.pop %v723
      %v831 = vtanh.pop %v725
      %v832 = vtanh.pop %v796
      %v833 = vtanh.pop %v798
      %v834 = vtanh.pop %v729
      %v835 = vtanh.pop %v731
      %v836 = vtanh.pop %v802
      %v837 = vtanh.pop %v804
      %v838 = vtanh.pop %v733
      %v839 = vtanh.pop %v735
      %v840 = vtanh.pop %v806
      %v841 = vtanh.pop %v808
      %v842 = vld [vmem:[%s4] sm:$0xf]
      %v844 = vlaneseq
      %v845 = vshrl.u32 %v844, 7
      %v846 = vsub.s32 0, %v845
      %v847 = vrot.slane %v842, %v846
      %v848 = vlaneseq
      %v849 = vshrl.u32 %v848, 7
      %v850 = vsub.s32 1, %v849
      %v851 = vrot.slane %v842, %v850
      %v852 = vlaneseq
      %v853 = vshrl.u32 %v852, 7
      %v854 = vsub.s32 2, %v853
      %v855 = vrot.slane %v842, %v854
      %v856 = vlaneseq
      %v857 = vshrl.u32 %v856, 7
      %v858 = vsub.s32 3, %v857
      %v859 = vrot.slane %v842, %v858
      %v864 = vmul.f32 %v810, %v847
      %v865 = vmul.f32 %v811, %v851
      %v866 = vmul.f32 %v812, %v855
      %v867 = vmul.f32 %v813, %v859
      %v868 = vmul.f32 %v814, %v847
      %v869 = vmul.f32 %v815, %v851
      %v870 = vmul.f32 %v816, %v855
      %v871 = vmul.f32 %v817, %v859
      %v872 = vmul.f32 %v818, %v847
      %v873 = vmul.f32 %v819, %v851
      %v874 = vmul.f32 %v820, %v855
      %v875 = vmul.f32 %v821, %v859
      %v876 = vmul.f32 %v822, %v847
      %v877 = vmul.f32 %v823, %v851
      %v878 = vmul.f32 %v824, %v855
      %v879 = vmul.f32 %v825, %v859
      %v880 = vmul.f32 %v826, %v847
      %v881 = vmul.f32 %v827, %v851
      %v882 = vmul.f32 %v828, %v855
      %v883 = vmul.f32 %v829, %v859
      %v884 = vmul.f32 %v830, %v847
      %v885 = vmul.f32 %v831, %v851
      %v886 = vmul.f32 %v832, %v855
      %v887 = vmul.f32 %v833, %v859
      %v888 = vmul.f32 %v834, %v847
      %v889 = vmul.f32 %v835, %v851
      %v890 = vmul.f32 %v836, %v855
      %v891 = vmul.f32 %v837, %v859
      %v892 = vmul.f32 %v838, %v847
      %v893 = vmul.f32 %v839, %v851
      %v894 = vmul.f32 %v840, %v855
      %v895 = vmul.f32 %v841, %v859
      %v896 = vadd.f32 %v864, %v865
      %v897 = vadd.f32 %v896, %v866
      %v898 = vadd.f32 %v897, %v867
      %899 = vadd.xlane.f32.xlu0 %v898
      %v900 = vpop.xlane.xlu0 %899
      %v901 = vadd.f32 %v868, %v869
      %v902 = vadd.f32 %v901, %v870
      %v903 = vadd.f32 %v902, %v871
      %904 = vadd.xlane.f32.xlu0 %v903
      %v905 = vpop.xlane.xlu0 %904
      %v906 = vadd.f32 %v872, %v873
      %v907 = vadd.f32 %v906, %v874
      %v908 = vadd.f32 %v907, %v875
      %909 = vadd.xlane.f32.xlu0 %v908
      %v910 = vpop.xlane.xlu0 %909
      %v911 = vadd.f32 %v876, %v877
      %v912 = vadd.f32 %v911, %v878
      %v913 = vadd.f32 %v912, %v879
      %914 = vadd.xlane.f32.xlu0 %v913
      %v915 = vpop.xlane.xlu0 %914
      %v916 = vadd.f32 %v880, %v881
      %v917 = vadd.f32 %v916, %v882
      %v918 = vadd.f32 %v917, %v883
      %919 = vadd.xlane.f32.xlu0 %v918
      %v920 = vpop.xlane.xlu0 %919
      %v921 = vadd.f32 %v884, %v885
      %v922 = vadd.f32 %v921, %v886
      %v923 = vadd.f32 %v922, %v887
      %924 = vadd.xlane.f32.xlu0 %v923
      %v925 = vpop.xlane.xlu0 %924
      %v926 = vadd.f32 %v888, %v889
      %v927 = vadd.f32 %v926, %v890
      %v928 = vadd.f32 %v927, %v891
      %929 = vadd.xlane.f32.xlu0 %v928
      %v930 = vpop.xlane.xlu0 %929
      %v931 = vadd.f32 %v892, %v893
      %v932 = vadd.f32 %v931, %v894
      %v933 = vadd.f32 %v932, %v895
      %934 = vadd.xlane.f32.xlu0 %v933
      %v935 = vpop.xlane.xlu0 %934
      %v936 = vld [vmem:[#allocation4] sm:$0x1]
      %v938 = vlaneseq
      %v939 = vshrl.u32 %v938, 7
      %v940 = vsub.s32 0, %v939
      %v941 = vrot.slane %v936, %v940
      %942 = vset.pattern.permute.xlu0 0
      %943 = vperm.xlu0 %942, %v941
      %v944 = vpop.permute.xlu0 %943
      %v946 = vadd.f32 %v900, %v944
      %v947 = vadd.f32 %v905, %v944
      %v948 = vadd.f32 %v910, %v944
      %v949 = vadd.f32 %v915, %v944
      %v950 = vadd.f32 %v920, %v944
      %v951 = vadd.f32 %v925, %v944
      %v952 = vadd.f32 %v930, %v944
      %v953 = vadd.f32 %v935, %v944
      %v962 = vlaneseq
      %v963 = vand.u32 %v962, 127
      %v964 = vlaneseq
      %v965 = vshrl.u32 %v964, 7
      %v966 = vsub.s32 %v963, %v965
      %v967 = vrot.slane %v946, %v966
      %v968 = vlaneseq
      %v969 = vshrl.u32 %v968, 7
      %v970 = vsub.s32 %v963, %v969
      %v971 = vrot.slane %v947, %v970
      %v972 = vlaneseq
      %v973 = vshrl.u32 %v972, 7
      %v974 = vsub.s32 %v963, %v973
      %v975 = vrot.slane %v948, %v974
      %v976 = vlaneseq
      %v977 = vshrl.u32 %v976, 7
      %v978 = vsub.s32 %v963, %v977
      %v979 = vrot.slane %v949, %v978
      %v980 = vlaneseq
      %v981 = vshrl.u32 %v980, 7
      %v982 = vsub.s32 %v963, %v981
      %v983 = vrot.slane %v950, %v982
      %v984 = vlaneseq
      %v985 = vshrl.u32 %v984, 7
      %v986 = vsub.s32 %v963, %v985
      %v987 = vrot.slane %v951, %v986
      %v988 = vlaneseq
      %v989 = vshrl.u32 %v988, 7
      %v990 = vsub.s32 %v963, %v989
      %v991 = vrot.slane %v952, %v990
      %v992 = vlaneseq
      %v993 = vshrl.u32 %v992, 7
      %v994 = vsub.s32 %v963, %v993
      %v995 = vrot.slane %v953, %v994
      %vm996 = vcmask 1041409
      %v997 = vsel %vm996, %v971, %v967
      %vm998 = vcmask 1042434
      %v999 = vsel %vm998, %v975, %v997
      %vm1000 = vcmask 1043459
      %v1001 = vsel %vm1000, %v979, %v999
      %vm1002 = vcmask 1044484
      %v1003 = vsel %vm1002, %v983, %v1001
      %vm1004 = vcmask 1045509
      %v1005 = vsel %vm1004, %v987, %v1003
      %vm1006 = vcmask 1046534
      %v1007 = vsel %vm1006, %v991, %v1005
      %vm1008 = vcmask 1047559
      %v1009 = vsel %vm1008, %v995, %v1007
      %vm1011 = vcmask 64512
      %v1012 = vsel %vm1011, %v1009, -inf
      %1013 = vmax.xlane.f32.xlu0 %v1012
      %v1014 = vpop.xlane.xlu0 %1013
      %v1016 = vlaneseq
      %v1017 = vshrl.u32 %v1016, 7
      %v1018 = vsub.s32 0, %v1017
      %v1019 = vrot.slane %v1014, %v1018
      %v1020 = vlaneseq
      %v1021 = vshrl.u32 %v1020, 7
      %v1022 = vsub.s32 1, %v1021
      %v1023 = vrot.slane %v1014, %v1022
      %v1024 = vlaneseq
      %v1025 = vshrl.u32 %v1024, 7
      %v1026 = vsub.s32 2, %v1025
      %v1027 = vrot.slane %v1014, %v1026
      %v1028 = vlaneseq
      %v1029 = vshrl.u32 %v1028, 7
      %v1030 = vsub.s32 3, %v1029
      %v1031 = vrot.slane %v1014, %v1030
      %v1032 = vlaneseq
      %v1033 = vshrl.u32 %v1032, 7
      %v1034 = vsub.s32 4, %v1033
      %v1035 = vrot.slane %v1014, %v1034
      %v1036 = vlaneseq
      %v1037 = vshrl.u32 %v1036, 7
      %v1038 = vsub.s32 5, %v1037
      %v1039 = vrot.slane %v1014, %v1038
      %v1040 = vlaneseq
      %v1041 = vshrl.u32 %v1040, 7
      %v1042 = vsub.s32 6, %v1041
      %v1043 = vrot.slane %v1014, %v1042
      %v1044 = vlaneseq
      %v1045 = vshrl.u32 %v1044, 7
      %v1046 = vsub.s32 7, %v1045
      %v1047 = vrot.slane %v1014, %v1046
      %v1056 = vsub.f32 %v946, %v1019
      %v1057 = vsub.f32 %v947, %v1023
      %v1058 = vsub.f32 %v948, %v1027
      %v1059 = vsub.f32 %v949, %v1031
      %v1060 = vsub.f32 %v950, %v1035
      %v1061 = vsub.f32 %v951, %v1039
      %v1062 = vsub.f32 %v952, %v1043
      %v1063 = vsub.f32 %v953, %v1047
      %v1064 = vmul.f32 %v1056, 1.442695
      %v1065 = vpow.pop %v1064
      %v1066 = vmul.f32 %v1057, 1.442695
      %v1067 = vpow.pop %v1066
      %v1068 = vmul.f32 %v1058, 1.442695
      %v1069 = vpow.pop %v1068
      %v1070 = vmul.f32 %v1059, 1.442695
      %v1071 = vpow.pop %v1070
      %v1072 = vmul.f32 %v1060, 1.442695
      %v1073 = vpow.pop %v1072
      %v1074 = vmul.f32 %v1061, 1.442695
      %v1075 = vpow.pop %v1074
      %v1076 = vmul.f32 %v1062, 1.442695
      %v1077 = vpow.pop %v1076
      %v1078 = vmul.f32 %v1063, 1.442695
      %v1079 = vpow.pop %v1078
      %1088 = vset.pattern.permute.xlu0 0
      %1089 = vperm.xlu0 %1088, %v1065
      %v1090 = vpop.permute.xlu0 %1089
      %1091 = vset.pattern.permute.xlu0 0
      %1092 = vperm.xlu0 %1091, %v1067
      %v1093 = vpop.permute.xlu0 %1092
      %1094 = vset.pattern.permute.xlu0 0
      %1095 = vperm.xlu0 %1094, %v1069
      %v1096 = vpop.permute.xlu0 %1095
      %1097 = vset.pattern.permute.xlu0 0
      %1098 = vperm.xlu0 %1097, %v1071
      %v1099 = vpop.permute.xlu0 %1098
      %1100 = vset.pattern.permute.xlu0 0
      %1101 = vperm.xlu0 %1100, %v1073
      %v1102 = vpop.permute.xlu0 %1101
      %1103 = vset.pattern.permute.xlu0 0
      %1104 = vperm.xlu0 %1103, %v1075
      %v1105 = vpop.permute.xlu0 %1104
      %1106 = vset.pattern.permute.xlu0 0
      %1107 = vperm.xlu0 %1106, %v1077
      %v1108 = vpop.permute.xlu0 %1107
      %1109 = vset.pattern.permute.xlu0 0
      %1110 = vperm.xlu0 %1109, %v1079
      %v1111 = vpop.permute.xlu0 %1110
      %v1112 = vlaneseq
      %v1113 = vshrl.u32 %v1112, 7
      %v1114 = vsub.s32 %v963, %v1113
      %v1115 = vrot.slane %v1090, %v1114
      %v1116 = vlaneseq
      %v1117 = vshrl.u32 %v1116, 7
      %v1118 = vsub.s32 %v963, %v1117
      %v1119 = vrot.slane %v1093, %v1118
      %v1120 = vlaneseq
      %v1121 = vshrl.u32 %v1120, 7
      %v1122 = vsub.s32 %v963, %v1121
      %v1123 = vrot.slane %v1096, %v1122
      %v1124 = vlaneseq
      %v1125 = vshrl.u32 %v1124, 7
      %v1126 = vsub.s32 %v963, %v1125
      %v1127 = vrot.slane %v1099, %v1126
      %v1128 = vlaneseq
      %v1129 = vshrl.u32 %v1128, 7
      %v1130 = vsub.s32 %v963, %v1129
      %v1131 = vrot.slane %v1102, %v1130
      %v1132 = vlaneseq
      %v1133 = vshrl.u32 %v1132, 7
      %v1134 = vsub.s32 %v963, %v1133
      %v1135 = vrot.slane %v1105, %v1134
      %v1136 = vlaneseq
      %v1137 = vshrl.u32 %v1136, 7
      %v1138 = vsub.s32 %v963, %v1137
      %v1139 = vrot.slane %v1108, %v1138
      %v1140 = vlaneseq
      %v1141 = vshrl.u32 %v1140, 7
      %v1142 = vsub.s32 %v963, %v1141
      %v1143 = vrot.slane %v1111, %v1142
      %v1144 = vsel %vm996, %v1119, %v1115
      %v1145 = vsel %vm998, %v1123, %v1144
      %v1146 = vsel %vm1000, %v1127, %v1145
      %v1147 = vsel %vm1002, %v1131, %v1146
      %v1148 = vsel %vm1004, %v1135, %v1147
      %v1149 = vsel %vm1006, %v1139, %v1148
      %v1150 = vsel %vm1008, %v1143, %v1149
      %v1152 = vsel %vm1011, %v1150, 0.0
      %1153 = vadd.xlane.f32.xlu0 %v1152
      %v1154 = vpop.xlane.xlu0 %1153
      %v1155 = vrcp.pop %v1154
      %v1157 = vlaneseq
      %v1158 = vshrl.u32 %v1157, 7
      %v1159 = vsub.s32 0, %v1158
      %v1160 = vrot.slane %v1155, %v1159
      %v1161 = vlaneseq
      %v1162 = vshrl.u32 %v1161, 7
      %v1163 = vsub.s32 1, %v1162
      %v1164 = vrot.slane %v1155, %v1163
      %v1165 = vlaneseq
      %v1166 = vshrl.u32 %v1165, 7
      %v1167 = vsub.s32 2, %v1166
      %v1168 = vrot.slane %v1155, %v1167
      %v1169 = vlaneseq
      %v1170 = vshrl.u32 %v1169, 7
      %v1171 = vsub.s32 3, %v1170
      %v1172 = vrot.slane %v1155, %v1171
      %v1173 = vlaneseq
      %v1174 = vshrl.u32 %v1173, 7
      %v1175 = vsub.s32 4, %v1174
      %v1176 = vrot.slane %v1155, %v1175
      %v1177 = vlaneseq
      %v1178 = vshrl.u32 %v1177, 7
      %v1179 = vsub.s32 5, %v1178
      %v1180 = vrot.slane %v1155, %v1179
      %v1181 = vlaneseq
      %v1182 = vshrl.u32 %v1181, 7
      %v1183 = vsub.s32 6, %v1182
      %v1184 = vrot.slane %v1155, %v1183
      %v1185 = vlaneseq
      %v1186 = vshrl.u32 %v1185, 7
      %v1187 = vsub.s32 7, %v1186
      %v1188 = vrot.slane %v1155, %v1187
      %v1197 = vmul.f32 %v1065, %v1160
      %v1198 = vmul.f32 %v1067, %v1164
      %v1199 = vmul.f32 %v1069, %v1168
      %v1200 = vmul.f32 %v1071, %v1172
      %v1201 = vmul.f32 %v1073, %v1176
      %v1202 = vmul.f32 %v1075, %v1180
      %v1203 = vmul.f32 %v1077, %v1184
      %v1204 = vmul.f32 %v1079, %v1188
      %v1205 = vpack.c.bf16 %v1197, %v1197
      %v1206 = vpack.c.bf16 %v1198, %v1198
      %v1207 = vpack.c.bf16 %v1199, %v1199
      %v1208 = vpack.c.bf16 %v1200, %v1200
      %v1209 = vpack.c.bf16 %v1201, %v1201
      %v1210 = vpack.c.bf16 %v1202, %v1202
      %v1211 = vpack.c.bf16 %v1203, %v1203
      %v1212 = vpack.c.bf16 %v1204, %v1204
      %v1214 = vunpack.c.l.b16 %v1205
      %1215 = vset.pattern.permute.xlu0 0
      %1216 = vperm.xlu0 %1215, %v1214
      %v1217 = vpop.permute.xlu0 %1216
      %v1218 = vlaneseq
      %v1219 = vshrl.u32 %v1218, 7
      %v1220 = vsub.s32 %v963, %v1219
      %v1221 = vrot.slane %v1217, %v1220
      %v1222 = vpack.c.b16 %v1221, %v1221
      %v1224 = vsel %vm1011, %v1222, 0
      %vm1226 = vcmask 1043456
      %v1228 = vsel %vm1226, %v505, 0
      %1230 = vmatprep.subr.bf16.mxu0 0
      %1231 = vmatpush1.bf16.msra.mxu0 0
      %1232 = vmatprep.subr.bf16.mxu0 0
      %1233 = vmatpush1.bf16.msra.mxu0 0
      %1234 = vmatprep.subr.bf16.mxu0 0
      %1235 = vmatpush1.bf16.msra.mxu0 0
      %1236 = vmatprep.subr.bf16.mxu0 0
      %1237 = vmatpush1.bf16.msra.mxu0 0
      %1238 = vmatprep.subr.bf16.mxu0 0
      %1239 = vmatpush1.bf16.msra.mxu0 0
      %1240 = vmatprep.subr.bf16.mxu0 0
      %1241 = vmatpush1.bf16.msra.mxu0 0
      %1242 = vmatprep.subr.bf16.mxu0 0
      %1243 = vmatpush1.bf16.msra.mxu0 0
      %1244 = vmatprep.subr.bf16.mxu0 0
      %1245 = vmatpush1.bf16.msra.mxu0 %v1228
      %1246 = vmatprep.subr.bf16.mxu0 0
      %1247 = vmatpush2.bf16.msra.mxu0 0
      %1248 = vmatprep.subr.bf16.mxu0 0
      %1249 = vmatpush2.bf16.msra.mxu0 0
      %1250 = vmatprep.subr.bf16.mxu0 0
      %1251 = vmatpush2.bf16.msra.mxu0 0
      %1252 = vmatprep.subr.bf16.mxu0 0
      %1253 = vmatpush2.bf16.msra.mxu0 0
      %1254 = vmatprep.subr.bf16.mxu0 0
      %1255 = vmatpush2.bf16.msra.mxu0 0
      %1256 = vmatprep.subr.bf16.mxu0 0
      %1257 = vmatpush2.bf16.msra.mxu0 0
      %1258 = vmatprep.subr.bf16.mxu0 0
      %1259 = vmatpush2.bf16.msra.mxu0 0
      %1260 = vmatprep.subr.bf16.mxu0 0
      %1261 = vmatpush2.bf16.msra.mxu0 0
      %1262 = vmatprep.mubr.bf16.mxu0 0
      %1263 = vmatmul.mubr.bf16.gmra.mxu0 %v1224
      %v1264 = vpop.f32.mrf.mxu0
      %v1265 = vadd.f32 0.0, %v1264
      %v1266 = vpop.f32.mrf.mxu0
      %v1267 = vpop.f32.mrf.mxu0
      %v1268 = vpop.f32.mrf.mxu0
      %1269 = vdwg.mxu0
      %v1271 = vunpack.c.l.b16 %v1206
      %1272 = vset.pattern.permute.xlu0 0
      %1273 = vperm.xlu0 %1272, %v1271
      %v1274 = vpop.permute.xlu0 %1273
      %v1275 = vlaneseq
      %v1276 = vshrl.u32 %v1275, 7
      %v1277 = vsub.s32 %v963, %v1276
      %v1278 = vrot.slane %v1274, %v1277
      %v1279 = vpack.c.b16 %v1278, %v1278
      %v1281 = vsel %vm1011, %v1279, 0
      %v1284 = vsel %vm1226, %v506, 0
      %1286 = vmatprep.subr.bf16.mxu0 0
      %1287 = vmatpush1.bf16.msra.mxu0 0
      %1288 = vmatprep.subr.bf16.mxu0 0
      %1289 = vmatpush1.bf16.msra.mxu0 0
      %1290 = vmatprep.subr.bf16.mxu0 0
      %1291 = vmatpush1.bf16.msra.mxu0 0
      %1292 = vmatprep.subr.bf16.mxu0 0
      %1293 = vmatpush1.bf16.msra.mxu0 0
      %1294 = vmatprep.subr.bf16.mxu0 0
      %1295 = vmatpush1.bf16.msra.mxu0 0
      %1296 = vmatprep.subr.bf16.mxu0 0
      %1297 = vmatpush1.bf16.msra.mxu0 0
      %1298 = vmatprep.subr.bf16.mxu0 0
      %1299 = vmatpush1.bf16.msra.mxu0 0
      %1300 = vmatprep.subr.bf16.mxu0 0
      %1301 = vmatpush1.bf16.msra.mxu0 %v1284
      %1302 = vmatprep.subr.bf16.mxu0 0
      %1303 = vmatpush2.bf16.msra.mxu0 0
      %1304 = vmatprep.subr.bf16.mxu0 0
      %1305 = vmatpush2.bf16.msra.mxu0 0
      %1306 = vmatprep.subr.bf16.mxu0 0
      %1307 = vmatpush2.bf16.msra.mxu0 0
      %1308 = vmatprep.subr.bf16.mxu0 0
      %1309 = vmatpush2.bf16.msra.mxu0 0
      %1310 = vmatprep.subr.bf16.mxu0 0
      %1311 = vmatpush2.bf16.msra.mxu0 0
      %1312 = vmatprep.subr.bf16.mxu0 0
      %1313 = vmatpush2.bf16.msra.mxu0 0
      %1314 = vmatprep.subr.bf16.mxu0 0
      %1315 = vmatpush2.bf16.msra.mxu0 0
      %1316 = vmatprep.subr.bf16.mxu0 0
      %1317 = vmatpush2.bf16.msra.mxu0 0
      %1318 = vmatprep.mubr.bf16.mxu0 0
      %1319 = vmatmul.mubr.bf16.gmra.mxu0 %v1281
      %v1320 = vpop.f32.mrf.mxu0
      %v1321 = vadd.f32 0.0, %v1320
      %v1322 = vpop.f32.mrf.mxu0
      %v1323 = vpop.f32.mrf.mxu0
      %v1324 = vpop.f32.mrf.mxu0
      %1325 = vdwg.mxu0
      %v1327 = vunpack.c.l.b16 %v1207
      %1328 = vset.pattern.permute.xlu0 0
      %1329 = vperm.xlu0 %1328, %v1327
      %v1330 = vpop.permute.xlu0 %1329
      %v1331 = vlaneseq
      %v1332 = vshrl.u32 %v1331, 7
      %v1333 = vsub.s32 %v963, %v1332
      %v1334 = vrot.slane %v1330, %v1333
      %v1335 = vpack.c.b16 %v1334, %v1334
      %v1337 = vsel %vm1011, %v1335, 0
      %v1340 = vsel %vm1226, %v507, 0
      %1342 = vmatprep.subr.bf16.mxu0 0
      %1343 = vmatpush1.bf16.msra.mxu0 0
      %1344 = vmatprep.subr.bf16.mxu0 0
      %1345 = vmatpush1.bf16.msra.mxu0 0
      %1346 = vmatprep.subr.bf16.mxu0 0
      %1347 = vmatpush1.bf16.msra.mxu0 0
      %1348 = vmatprep.subr.bf16.mxu0 0
      %1349 = vmatpush1.bf16.msra.mxu0 0
      %1350 = vmatprep.subr.bf16.mxu0 0
      %1351 = vmatpush1.bf16.msra.mxu0 0
      %1352 = vmatprep.subr.bf16.mxu0 0
      %1353 = vmatpush1.bf16.msra.mxu0 0
      %1354 = vmatprep.subr.bf16.mxu0 0
      %1355 = vmatpush1.bf16.msra.mxu0 0
      %1356 = vmatprep.subr.bf16.mxu0 0
      %1357 = vmatpush1.bf16.msra.mxu0 %v1340
      %1358 = vmatprep.subr.bf16.mxu0 0
      %1359 = vmatpush2.bf16.msra.mxu0 0
      %1360 = vmatprep.subr.bf16.mxu0 0
      %1361 = vmatpush2.bf16.msra.mxu0 0
      %1362 = vmatprep.subr.bf16.mxu0 0
      %1363 = vmatpush2.bf16.msra.mxu0 0
      %1364 = vmatprep.subr.bf16.mxu0 0
      %1365 = vmatpush2.bf16.msra.mxu0 0
      %1366 = vmatprep.subr.bf16.mxu0 0
      %1367 = vmatpush2.bf16.msra.mxu0 0
      %1368 = vmatprep.subr.bf16.mxu0 0
      %1369 = vmatpush2.bf16.msra.mxu0 0
      %1370 = vmatprep.subr.bf16.mxu0 0
      %1371 = vmatpush2.bf16.msra.mxu0 0
      %1372 = vmatprep.subr.bf16.mxu0 0
      %1373 = vmatpush2.bf16.msra.mxu0 0
      %1374 = vmatprep.mubr.bf16.mxu0 0
      %1375 = vmatmul.mubr.bf16.gmra.mxu0 %v1337
      %v1376 = vpop.f32.mrf.mxu0
      %v1377 = vadd.f32 0.0, %v1376
      %v1378 = vpop.f32.mrf.mxu0
      %v1379 = vpop.f32.mrf.mxu0
      %v1380 = vpop.f32.mrf.mxu0
      %1381 = vdwg.mxu0
      %v1383 = vunpack.c.l.b16 %v1208
      %1384 = vset.pattern.permute.xlu0 0
      %1385 = vperm.xlu0 %1384, %v1383
      %v1386 = vpop.permute.xlu0 %1385
      %v1387 = vlaneseq
      %v1388 = vshrl.u32 %v1387, 7
      %v1389 = vsub.s32 %v963, %v1388
      %v1390 = vrot.slane %v1386, %v1389
      %v1391 = vpack.c.b16 %v1390, %v1390
      %v1393 = vsel %vm1011, %v1391, 0
      %v1396 = vsel %vm1226, %v508, 0
      %1398 = vmatprep.subr.bf16.mxu0 0
      %1399 = vmatpush1.bf16.msra.mxu0 0
      %1400 = vmatprep.subr.bf16.mxu0 0
      %1401 = vmatpush1.bf16.msra.mxu0 0
      %1402 = vmatprep.subr.bf16.mxu0 0
      %1403 = vmatpush1.bf16.msra.mxu0 0
      %1404 = vmatprep.subr.bf16.mxu0 0
      %1405 = vmatpush1.bf16.msra.mxu0 0
      %1406 = vmatprep.subr.bf16.mxu0 0
      %1407 = vmatpush1.bf16.msra.mxu0 0
      %1408 = vmatprep.subr.bf16.mxu0 0
      %1409 = vmatpush1.bf16.msra.mxu0 0
      %1410 = vmatprep.subr.bf16.mxu0 0
      %1411 = vmatpush1.bf16.msra.mxu0 0
      %1412 = vmatprep.subr.bf16.mxu0 0
      %1413 = vmatpush1.bf16.msra.mxu0 %v1396
      %1414 = vmatprep.subr.bf16.mxu0 0
      %1415 = vmatpush2.bf16.msra.mxu0 0
      %1416 = vmatprep.subr.bf16.mxu0 0
      %1417 = vmatpush2.bf16.msra.mxu0 0
      %1418 = vmatprep.subr.bf16.mxu0 0
      %1419 = vmatpush2.bf16.msra.mxu0 0
      %1420 = vmatprep.subr.bf16.mxu0 0
      %1421 = vmatpush2.bf16.msra.mxu0 0
      %1422 = vmatprep.subr.bf16.mxu0 0
      %1423 = vmatpush2.bf16.msra.mxu0 0
      %1424 = vmatprep.subr.bf16.mxu0 0
      %1425 = vmatpush2.bf16.msra.mxu0 0
      %1426 = vmatprep.subr.bf16.mxu0 0
      %1427 = vmatpush2.bf16.msra.mxu0 0
      %1428 = vmatprep.subr.bf16.mxu0 0
      %1429 = vmatpush2.bf16.msra.mxu0 0
      %1430 = vmatprep.mubr.bf16.mxu0 0
      %1431 = vmatmul.mubr.bf16.gmra.mxu0 %v1393
      %v1432 = vpop.f32.mrf.mxu0
      %v1433 = vadd.f32 0.0, %v1432
      %v1434 = vpop.f32.mrf.mxu0
      %v1435 = vpop.f32.mrf.mxu0
      %v1436 = vpop.f32.mrf.mxu0
      %1437 = vdwg.mxu0
      %v1439 = vunpack.c.l.b16 %v1209
      %1440 = vset.pattern.permute.xlu0 0
      %1441 = vperm.xlu0 %1440, %v1439
      %v1442 = vpop.permute.xlu0 %1441
      %v1443 = vlaneseq
      %v1444 = vshrl.u32 %v1443, 7
      %v1445 = vsub.s32 %v963, %v1444
      %v1446 = vrot.slane %v1442, %v1445
      %v1447 = vpack.c.b16 %v1446, %v1446
      %v1449 = vsel %vm1011, %v1447, 0
      %v1452 = vsel %vm1226, %v509, 0
      %1454 = vmatprep.subr.bf16.mxu0 0
      %1455 = vmatpush1.bf16.msra.mxu0 0
      %1456 = vmatprep.subr.bf16.mxu0 0
      %1457 = vmatpush1.bf16.msra.mxu0 0
      %1458 = vmatprep.subr.bf16.mxu0 0
      %1459 = vmatpush1.bf16.msra.mxu0 0
      %1460 = vmatprep.subr.bf16.mxu0 0
      %1461 = vmatpush1.bf16.msra.mxu0 0
      %1462 = vmatprep.subr.bf16.mxu0 0
      %1463 = vmatpush1.bf16.msra.mxu0 0
      %1464 = vmatprep.subr.bf16.mxu0 0
      %1465 = vmatpush1.bf16.msra.mxu0 0
      %1466 = vmatprep.subr.bf16.mxu0 0
      %1467 = vmatpush1.bf16.msra.mxu0 0
      %1468 = vmatprep.subr.bf16.mxu0 0
      %1469 = vmatpush1.bf16.msra.mxu0 %v1452
      %1470 = vmatprep.subr.bf16.mxu0 0
      %1471 = vmatpush2.bf16.msra.mxu0 0
      %1472 = vmatprep.subr.bf16.mxu0 0
      %1473 = vmatpush2.bf16.msra.mxu0 0
      %1474 = vmatprep.subr.bf16.mxu0 0
      %1475 = vmatpush2.bf16.msra.mxu0 0
      %1476 = vmatprep.subr.bf16.mxu0 0
      %1477 = vmatpush2.bf16.msra.mxu0 0
      %1478 = vmatprep.subr.bf16.mxu0 0
      %1479 = vmatpush2.bf16.msra.mxu0 0
      %1480 = vmatprep.subr.bf16.mxu0 0
      %1481 = vmatpush2.bf16.msra.mxu0 0
      %1482 = vmatprep.subr.bf16.mxu0 0
      %1483 = vmatpush2.bf16.msra.mxu0 0
      %1484 = vmatprep.subr.bf16.mxu0 0
      %1485 = vmatpush2.bf16.msra.mxu0 0
      %1486 = vmatprep.mubr.bf16.mxu0 0
      %1487 = vmatmul.mubr.bf16.gmra.mxu0 %v1449
      %v1488 = vpop.f32.mrf.mxu0
      %v1489 = vadd.f32 0.0, %v1488
      %v1490 = vpop.f32.mrf.mxu0
      %v1491 = vpop.f32.mrf.mxu0
      %v1492 = vpop.f32.mrf.mxu0
      %1493 = vdwg.mxu0
      %v1495 = vunpack.c.l.b16 %v1210
      %1496 = vset.pattern.permute.xlu0 0
      %1497 = vperm.xlu0 %1496, %v1495
      %v1498 = vpop.permute.xlu0 %1497
      %v1499 = vlaneseq
      %v1500 = vshrl.u32 %v1499, 7
      %v1501 = vsub.s32 %v963, %v1500
      %v1502 = vrot.slane %v1498, %v1501
      %v1503 = vpack.c.b16 %v1502, %v1502
      %v1505 = vsel %vm1011, %v1503, 0
      %v1508 = vsel %vm1226, %v510, 0
      %1510 = vmatprep.subr.bf16.mxu0 0
      %1511 = vmatpush1.bf16.msra.mxu0 0
      %1512 = vmatprep.subr.bf16.mxu0 0
      %1513 = vmatpush1.bf16.msra.mxu0 0
      %1514 = vmatprep.subr.bf16.mxu0 0
      %1515 = vmatpush1.bf16.msra.mxu0 0
      %1516 = vmatprep.subr.bf16.mxu0 0
      %1517 = vmatpush1.bf16.msra.mxu0 0
      %1518 = vmatprep.subr.bf16.mxu0 0
      %1519 = vmatpush1.bf16.msra.mxu0 0
      %1520 = vmatprep.subr.bf16.mxu0 0
      %1521 = vmatpush1.bf16.msra.mxu0 0
      %1522 = vmatprep.subr.bf16.mxu0 0
      %1523 = vmatpush1.bf16.msra.mxu0 0
      %1524 = vmatprep.subr.bf16.mxu0 0
      %1525 = vmatpush1.bf16.msra.mxu0 %v1508
      %1526 = vmatprep.subr.bf16.mxu0 0
      %1527 = vmatpush2.bf16.msra.mxu0 0
      %1528 = vmatprep.subr.bf16.mxu0 0
      %1529 = vmatpush2.bf16.msra.mxu0 0
      %1530 = vmatprep.subr.bf16.mxu0 0
      %1531 = vmatpush2.bf16.msra.mxu0 0
      %1532 = vmatprep.subr.bf16.mxu0 0
      %1533 = vmatpush2.bf16.msra.mxu0 0
      %1534 = vmatprep.subr.bf16.mxu0 0
      %1535 = vmatpush2.bf16.msra.mxu0 0
      %1536 = vmatprep.subr.bf16.mxu0 0
      %1537 = vmatpush2.bf16.msra.mxu0 0
      %1538 = vmatprep.subr.bf16.mxu0 0
      %1539 = vmatpush2.bf16.msra.mxu0 0
      %1540 = vmatprep.subr.bf16.mxu0 0
      %1541 = vmatpush2.bf16.msra.mxu0 0
      %1542 = vmatprep.mubr.bf16.mxu0 0
      %1543 = vmatmul.mubr.bf16.gmra.mxu0 %v1505
      %v1544 = vpop.f32.mrf.mxu0
      %v1545 = vadd.f32 0.0, %v1544
      %v1546 = vpop.f32.mrf.mxu0
      %v1547 = vpop.f32.mrf.mxu0
      %v1548 = vpop.f32.mrf.mxu0
      %1549 = vdwg.mxu0
      %v1551 = vunpack.c.l.b16 %v1211
      %1552 = vset.pattern.permute.xlu0 0
      %1553 = vperm.xlu0 %1552, %v1551
      %v1554 = vpop.permute.xlu0 %1553
      %v1555 = vlaneseq
      %v1556 = vshrl.u32 %v1555, 7
      %v1557 = vsub.s32 %v963, %v1556
      %v1558 = vrot.slane %v1554, %v1557
      %v1559 = vpack.c.b16 %v1558, %v1558
      %v1561 = vsel %vm1011, %v1559, 0
      %v1564 = vsel %vm1226, %v511, 0
      %1566 = vmatprep.subr.bf16.mxu0 0
      %1567 = vmatpush1.bf16.msra.mxu0 0
      %1568 = vmatprep.subr.bf16.mxu0 0
      %1569 = vmatpush1.bf16.msra.mxu0 0
      %1570 = vmatprep.subr.bf16.mxu0 0
      %1571 = vmatpush1.bf16.msra.mxu0 0
      %1572 = vmatprep.subr.bf16.mxu0 0
      %1573 = vmatpush1.bf16.msra.mxu0 0
      %1574 = vmatprep.subr.bf16.mxu0 0
      %1575 = vmatpush1.bf16.msra.mxu0 0
      %1576 = vmatprep.subr.bf16.mxu0 0
      %1577 = vmatpush1.bf16.msra.mxu0 0
      %1578 = vmatprep.subr.bf16.mxu0 0
      %1579 = vmatpush1.bf16.msra.mxu0 0
      %1580 = vmatprep.subr.bf16.mxu0 0
      %1581 = vmatpush1.bf16.msra.mxu0 %v1564
      %1582 = vmatprep.subr.bf16.mxu0 0
      %1583 = vmatpush2.bf16.msra.mxu0 0
      %1584 = vmatprep.subr.bf16.mxu0 0
      %1585 = vmatpush2.bf16.msra.mxu0 0
      %1586 = vmatprep.subr.bf16.mxu0 0
      %1587 = vmatpush2.bf16.msra.mxu0 0
      %1588 = vmatprep.subr.bf16.mxu0 0
      %1589 = vmatpush2.bf16.msra.mxu0 0
      %1590 = vmatprep.subr.bf16.mxu0 0
      %1591 = vmatpush2.bf16.msra.mxu0 0
      %1592 = vmatprep.subr.bf16.mxu0 0
      %1593 = vmatpush2.bf16.msra.mxu0 0
      %1594 = vmatprep.subr.bf16.mxu0 0
      %1595 = vmatpush2.bf16.msra.mxu0 0
      %1596 = vmatprep.subr.bf16.mxu0 0
      %1597 = vmatpush2.bf16.msra.mxu0 0
      %1598 = vmatprep.mubr.bf16.mxu0 0
      %1599 = vmatmul.mubr.bf16.gmra.mxu0 %v1561
      %v1600 = vpop.f32.mrf.mxu0
      %v1601 = vadd.f32 0.0, %v1600
      %v1602 = vpop.f32.mrf.mxu0
      %v1603 = vpop.f32.mrf.mxu0
      %v1604 = vpop.f32.mrf.mxu0
      %1605 = vdwg.mxu0
      %v1607 = vunpack.c.l.b16 %v1212
      %1608 = vset.pattern.permute.xlu0 0
      %1609 = vperm.xlu0 %1608, %v1607
      %v1610 = vpop.permute.xlu0 %1609
      %v1611 = vlaneseq
      %v1612 = vshrl.u32 %v1611, 7
      %v1613 = vsub.s32 %v963, %v1612
      %v1614 = vrot.slane %v1610, %v1613
      %v1615 = vpack.c.b16 %v1614, %v1614
      %v1617 = vsel %vm1011, %v1615, 0
      %v1620 = vsel %vm1226, %v512, 0
      %1622 = vmatprep.subr.bf16.mxu0 0
      %1623 = vmatpush1.bf16.msra.mxu0 0
      %1624 = vmatprep.subr.bf16.mxu0 0
      %1625 = vmatpush1.bf16.msra.mxu0 0
      %1626 = vmatprep.subr.bf16.mxu0 0
      %1627 = vmatpush1.bf16.msra.mxu0 0
      %1628 = vmatprep.subr.bf16.mxu0 0
      %1629 = vmatpush1.bf16.msra.mxu0 0
      %1630 = vmatprep.subr.bf16.mxu0 0
      %1631 = vmatpush1.bf16.msra.mxu0 0
      %1632 = vmatprep.subr.bf16.mxu0 0
      %1633 = vmatpush1.bf16.msra.mxu0 0
      %1634 = vmatprep.subr.bf16.mxu0 0
      %1635 = vmatpush1.bf16.msra.mxu0 0
      %1636 = vmatprep.subr.bf16.mxu0 0
      %1637 = vmatpush1.bf16.msra.mxu0 %v1620
      %1638 = vmatprep.subr.bf16.mxu0 0
      %1639 = vmatpush2.bf16.msra.mxu0 0
      %1640 = vmatprep.subr.bf16.mxu0 0
      %1641 = vmatpush2.bf16.msra.mxu0 0
      %1642 = vmatprep.subr.bf16.mxu0 0
      %1643 = vmatpush2.bf16.msra.mxu0 0
      %1644 = vmatprep.subr.bf16.mxu0 0
      %1645 = vmatpush2.bf16.msra.mxu0 0
      %1646 = vmatprep.subr.bf16.mxu0 0
      %1647 = vmatpush2.bf16.msra.mxu0 0
      %1648 = vmatprep.subr.bf16.mxu0 0
      %1649 = vmatpush2.bf16.msra.mxu0 0
      %1650 = vmatprep.subr.bf16.mxu0 0
      %1651 = vmatpush2.bf16.msra.mxu0 0
      %1652 = vmatprep.subr.bf16.mxu0 0
      %1653 = vmatpush2.bf16.msra.mxu0 0
      %1654 = vmatprep.mubr.bf16.mxu0 0
      %1655 = vmatmul.mubr.bf16.gmra.mxu0 %v1617
      %v1656 = vpop.f32.mrf.mxu0
      %v1657 = vadd.f32 0.0, %v1656
      %v1658 = vpop.f32.mrf.mxu0
      %v1659 = vpop.f32.mrf.mxu0
      %v1660 = vpop.f32.mrf.mxu0
      %1661 = vdwg.mxu0
      %v1662 = vpack.c.bf16 %v1265, %v1265
      %v1663 = vpack.c.bf16 %v1321, %v1321
      %v1664 = vpack.c.bf16 %v1377, %v1377
      %v1665 = vpack.c.bf16 %v1433, %v1433
      %v1666 = vpack.c.bf16 %v1489, %v1489
      %v1667 = vpack.c.bf16 %v1545, %v1545
      %v1668 = vpack.c.bf16 %v1601, %v1601
      %v1669 = vpack.c.bf16 %v1657, %v1657
      %v1670 = vld [vmem:[%s6] sm:$0xff]
      %v1671 = vld [vmem:[%s6 + $0x8] sm:$0xff]
      %v1672 = vld [vmem:[%s6 + $0x10] sm:$0xff]
      %v1673 = vld [vmem:[%s6 + $0x18] sm:$0xff]
      %v1674 = vld [vmem:[%s6 + $0x20] sm:$0xff]
      %v1675 = vld [vmem:[%s6 + $0x28] sm:$0xff]
      %v1676 = vld [vmem:[%s6 + $0x30] sm:$0xff]
      %v1677 = vld [vmem:[%s6 + $0x38] sm:$0xff]
      %v1678 = vld [vmem:[%s6 + $0x40] sm:$0xff]
      %v1679 = vld [vmem:[%s6 + $0x48] sm:$0xff]
      %v1680 = vld [vmem:[%s6 + $0x50] sm:$0xff]
      %v1681 = vld [vmem:[%s6 + $0x58] sm:$0xff]
      %v1682 = vld [vmem:[%s6 + $0x60] sm:$0xff]
      %v1683 = vld [vmem:[%s6 + $0x68] sm:$0xff]
      %v1684 = vld [vmem:[%s6 + $0x70] sm:$0xff]
      %v1685 = vld [vmem:[%s6 + $0x78] sm:$0xff]
      %v1686 = vld [vmem:[%s7] sm:$0xf]
      %v1688 = vlaneseq
      %v1689 = vshrl.u32 %v1688, 7
      %v1690 = vsub.s32 0, %v1689
      %v1691 = vrot.slane %v1686, %v1690
      %v1692 = vlaneseq
      %v1693 = vshrl.u32 %v1692, 7
      %v1694 = vsub.s32 1, %v1693
      %v1695 = vrot.slane %v1686, %v1694
      %v1696 = vlaneseq
      %v1697 = vshrl.u32 %v1696, 7
      %v1698 = vsub.s32 2, %v1697
      %v1699 = vrot.slane %v1686, %v1698
      %v1700 = vlaneseq
      %v1701 = vshrl.u32 %v1700, 7
      %v1702 = vsub.s32 3, %v1701
      %v1703 = vrot.slane %v1686, %v1702
      %v1716 = vunpack.c.l.b16 %v1662
      %v1717 = vunpack.c.l.b16 %v1663
      %v1718 = vunpack.c.l.b16 %v1664
      %v1719 = vunpack.c.l.b16 %v1665
      %v1720 = vunpack.c.l.b16 %v1666
      %v1721 = vunpack.c.l.b16 %v1667
      %v1722 = vunpack.c.l.b16 %v1668
      %v1723 = vunpack.c.l.b16 %v1669
      %v1724 = vrot.slane %v1717, 7
      %v1725 = vsel %vm996, %v1724, %v1716
      %v1726 = vrot.slane %v1718, 6
      %v1727 = vsel %vm998, %v1726, %v1725
      %v1728 = vrot.slane %v1719, 5
      %v1729 = vsel %vm1000, %v1728, %v1727
      %v1730 = vrot.slane %v1720, 4
      %v1731 = vsel %vm1002, %v1730, %v1729
      %v1732 = vrot.slane %v1721, 3
      %v1733 = vsel %vm1004, %v1732, %v1731
      %v1734 = vrot.slane %v1722, 2
      %v1735 = vsel %vm1006, %v1734, %v1733
      %v1736 = vrot.slane %v1723, 1
      %v1737 = vsel %vm1008, %v1736, %v1735
      %v1738 = vpack.c.b16 %v1737, %v1737
      %v1755 = vunpack.c.l.b16 %v1670
      %v1756 = vunpack.c.h.b16 %v1670
      %v1757 = vunpack.c.l.b16 %v1671
      %v1758 = vunpack.c.h.b16 %v1671
      %v1759 = vunpack.c.l.b16 %v1672
      %v1760 = vunpack.c.h.b16 %v1672
      %v1761 = vunpack.c.l.b16 %v1673
      %v1762 = vunpack.c.h.b16 %v1673
      %v1763 = vunpack.c.l.b16 %v1674
      %v1764 = vunpack.c.h.b16 %v1674
      %v1765 = vunpack.c.l.b16 %v1675
      %v1766 = vunpack.c.h.b16 %v1675
      %v1767 = vunpack.c.l.b16 %v1676
      %v1768 = vunpack.c.h.b16 %v1676
      %v1769 = vunpack.c.l.b16 %v1677
      %v1770 = vunpack.c.h.b16 %v1677
      %v1771 = vunpack.c.l.b16 %v1678
      %v1772 = vunpack.c.h.b16 %v1678
      %v1773 = vunpack.c.l.b16 %v1679
      %v1774 = vunpack.c.h.b16 %v1679
      %v1775 = vunpack.c.l.b16 %v1680
      %v1776 = vunpack.c.h.b16 %v1680
      %v1777 = vunpack.c.l.b16 %v1681
      %v1778 = vunpack.c.h.b16 %v1681
      %v1779 = vunpack.c.l.b16 %v1682
      %v1780 = vunpack.c.h.b16 %v1682
      %v1781 = vunpack.c.l.b16 %v1683
      %v1782 = vunpack.c.h.b16 %v1683
      %v1783 = vunpack.c.l.b16 %v1684
      %v1784 = vunpack.c.h.b16 %v1684
      %v1785 = vunpack.c.l.b16 %v1685
      %v1786 = vunpack.c.h.b16 %v1685
      %v1787 = vpack.c.b16 %v1759, %v1755
      %v1788 = vpack.c.b16 %v1760, %v1756
      %v1789 = vpack.c.b16 %v1761, %v1757
      %v1790 = vpack.c.b16 %v1762, %v1758
      %v1791 = vpack.c.b16 %v1767, %v1763
      %v1792 = vpack.c.b16 %v1768, %v1764
      %v1793 = vpack.c.b16 %v1769, %v1765
      %v1794 = vpack.c.b16 %v1770, %v1766
      %v1795 = vpack.c.b16 %v1775, %v1771
      %v1796 = vpack.c.b16 %v1776, %v1772
      %v1797 = vpack.c.b16 %v1777, %v1773
      %v1798 = vpack.c.b16 %v1778, %v1774
      %v1799 = vpack.c.b16 %v1783, %v1779
      %v1800 = vpack.c.b16 %v1784, %v1780
      %v1801 = vpack.c.b16 %v1785, %v1781
      %v1802 = vpack.c.b16 %v1786, %v1782
      %v1820 = vsel %vm651, %v1738, 0
      %1822 = vmatprep.subr.bf16.mxu0 0
      %1823 = vmatpush1.bf16.msra.mxu0 0
      %1824 = vmatprep.subr.bf16.mxu0 0
      %1825 = vmatpush1.bf16.msra.mxu0 0
      %1826 = vmatprep.subr.bf16.mxu0 0
      %1827 = vmatpush1.bf16.msra.mxu0 0
      %1828 = vmatprep.subr.bf16.mxu0 0
      %1829 = vmatpush1.bf16.msra.mxu0 0
      %1830 = vmatprep.subr.bf16.mxu0 %v1800
      %1831 = vmatpush1.bf16.msra.mxu0 %v1799
      %1832 = vmatprep.subr.bf16.mxu0 %v1796
      %1833 = vmatpush1.bf16.msra.mxu0 %v1795
      %1834 = vmatprep.subr.bf16.mxu0 %v1792
      %1835 = vmatpush1.bf16.msra.mxu0 %v1791
      %1836 = vmatprep.subr.bf16.mxu0 %v1788
      %1837 = vmatpush1.bf16.msra.mxu0 %v1787
      %1838 = vmatprep.subr.bf16.mxu0 0
      %1839 = vmatpush2.bf16.msra.mxu0 0
      %1840 = vmatprep.subr.bf16.mxu0 0
      %1841 = vmatpush2.bf16.msra.mxu0 0
      %1842 = vmatprep.subr.bf16.mxu0 0
      %1843 = vmatpush2.bf16.msra.mxu0 0
      %1844 = vmatprep.subr.bf16.mxu0 0
      %1845 = vmatpush2.bf16.msra.mxu0 0
      %1846 = vmatprep.subr.bf16.mxu0 0
      %1847 = vmatpush2.bf16.msra.mxu0 0
      %1848 = vmatprep.subr.bf16.mxu0 0
      %1849 = vmatpush2.bf16.msra.mxu0 0
      %1850 = vmatprep.subr.bf16.mxu0 0
      %1851 = vmatpush2.bf16.msra.mxu0 0
      %1852 = vmatprep.subr.bf16.mxu0 0
      %1853 = vmatpush2.bf16.msra.mxu0 0
      %1854 = vmatprep.mubr.bf16.mxu0 0
      %1855 = vmatmul.mubr.bf16.gmra.mxu0 %v1820
      %v1856 = vpop.f32.mrf.mxu0
      %v1857 = vadd.f32 %v1691, %v1856
      %v1858 = vpop.f32.mrf.mxu0
      %v1859 = vadd.f32 %v1695, %v1858
      %v1860 = vpop.f32.mrf.mxu0
      %v1861 = vpop.f32.mrf.mxu0
      %1862 = vdwg.mxu0
      %1863 = vmatprep.subr.bf16.mxu0 0
      %1864 = vmatpush1.bf16.msra.mxu0 0
      %1865 = vmatprep.subr.bf16.mxu0 0
      %1866 = vmatpush1.bf16.msra.mxu0 0
      %1867 = vmatprep.subr.bf16.mxu0 0
      %1868 = vmatpush1.bf16.msra.mxu0 0
      %1869 = vmatprep.subr.bf16.mxu0 0
      %1870 = vmatpush1.bf16.msra.mxu0 0
      %1871 = vmatprep.subr.bf16.mxu0 %v1802
      %1872 = vmatpush1.bf16.msra.mxu0 %v1801
      %1873 = vmatprep.subr.bf16.mxu0 %v1798
      %1874 = vmatpush1.bf16.msra.mxu0 %v1797
      %1875 = vmatprep.subr.bf16.mxu0 %v1794
      %1876 = vmatpush1.bf16.msra.mxu0 %v1793
      %1877 = vmatprep.subr.bf16.mxu0 %v1790
      %1878 = vmatpush1.bf16.msra.mxu0 %v1789
      %1879 = vmatprep.subr.bf16.mxu0 0
      %1880 = vmatpush2.bf16.msra.mxu0 0
      %1881 = vmatprep.subr.bf16.mxu0 0
      %1882 = vmatpush2.bf16.msra.mxu0 0
      %1883 = vmatprep.subr.bf16.mxu0 0
      %1884 = vmatpush2.bf16.msra.mxu0 0
      %1885 = vmatprep.subr.bf16.mxu0 0
      %1886 = vmatpush2.bf16.msra.mxu0 0
      %1887 = vmatprep.subr.bf16.mxu0 0
      %1888 = vmatpush2.bf16.msra.mxu0 0
      %1889 = vmatprep.subr.bf16.mxu0 0
      %1890 = vmatpush2.bf16.msra.mxu0 0
      %1891 = vmatprep.subr.bf16.mxu0 0
      %1892 = vmatpush2.bf16.msra.mxu0 0
      %1893 = vmatprep.subr.bf16.mxu0 0
      %1894 = vmatpush2.bf16.msra.mxu0 0
      %1895 = vmatprep.mubr.bf16.mxu0 0
      %1896 = vmatmul.mubr.bf16.gmra.mxu0 %v1820
      %v1897 = vpop.f32.mrf.mxu0
      %v1898 = vadd.f32 %v1699, %v1897
      %v1899 = vpop.f32.mrf.mxu0
      %v1900 = vadd.f32 %v1703, %v1899
      %v1901 = vpop.f32.mrf.mxu0
      %v1902 = vpop.f32.mrf.mxu0
      %1903 = vdwg.mxu0
      %v1904 = vld [vmem:[%s8] sm:$0xf]
      %v1905 = vld [vmem:[%s9] sm:$0xf]
      %v1906 = vadd.f32 %v1857, %v1859
      %v1907 = vadd.f32 %v1906, %v1898
      %v1908 = vadd.f32 %v1907, %v1900
      %1909 = vadd.xlane.f32.xlu0 %v1908
      %v1910 = vpop.xlane.xlu0 %1909
      %v1911 = vrcp.pop 512.0
      %v1912 = vmul.f32 %v1910, %v1911
      %v1913 = vsub.f32 %v1857, %v1912
      %v1914 = vsub.f32 %v1859, %v1912
      %v1915 = vsub.f32 %v1898, %v1912
      %v1916 = vsub.f32 %v1900, %v1912
      %v1917 = vmul.f32 %v1913, %v1913
      %v1918 = vmul.f32 %v1914, %v1914
      %v1919 = vmul.f32 %v1915, %v1915
      %v1920 = vmul.f32 %v1916, %v1916
      %v1921 = vadd.f32 %v1917, %v1918
      %v1922 = vadd.f32 %v1921, %v1919
      %v1923 = vadd.f32 %v1922, %v1920
      %1924 = vadd.xlane.f32.xlu0 %v1923
      %v1925 = vpop.xlane.xlu0 %1924
      %v1926 = vmul.f32 %v1925, %v1911
      %v1927 = vadd.f32 %v1926, 1e-05
      %v1928 = vrsqrt.pop %v1927
      %v1929 = vmul.f32 %v1913, %v1928
      %v1930 = vmul.f32 %v1914, %v1928
      %v1931 = vmul.f32 %v1915, %v1928
      %v1932 = vmul.f32 %v1916, %v1928
      %v1934 = vlaneseq
      %v1935 = vshrl.u32 %v1934, 7
      %v1936 = vsub.s32 0, %v1935
      %v1937 = vrot.slane %v1904, %v1936
      %v1938 = vlaneseq
      %v1939 = vshrl.u32 %v1938, 7
      %v1940 = vsub.s32 1, %v1939
      %v1941 = vrot.slane %v1904, %v1940
      %v1942 = vlaneseq
      %v1943 = vshrl.u32 %v1942, 7
      %v1944 = vsub.s32 2, %v1943
      %v1945 = vrot.slane %v1904, %v1944
      %v1946 = vlaneseq
      %v1947 = vshrl.u32 %v1946, 7
      %v1948 = vsub.s32 3, %v1947
      %v1949 = vrot.slane %v1904, %v1948
      %v1954 = vmul.f32 %v1929, %v1937
      %v1955 = vmul.f32 %v1930, %v1941
      %v1956 = vmul.f32 %v1931, %v1945
      %v1957 = vmul.f32 %v1932, %v1949
      %v1959 = vlaneseq
      %v1960 = vshrl.u32 %v1959, 7
      %v1961 = vsub.s32 0, %v1960
      %v1962 = vrot.slane %v1905, %v1961
      %v1963 = vlaneseq
      %v1964 = vshrl.u32 %v1963, 7
      %v1965 = vsub.s32 1, %v1964
      %v1966 = vrot.slane %v1905, %v1965
      %v1967 = vlaneseq
      %v1968 = vshrl.u32 %v1967, 7
      %v1969 = vsub.s32 2, %v1968
      %v1970 = vrot.slane %v1905, %v1969
      %v1971 = vlaneseq
      %v1972 = vshrl.u32 %v1971, 7
      %v1973 = vsub.s32 3, %v1972
      %v1974 = vrot.slane %v1905, %v1973
      %v1979 = vadd.f32 %v1954, %v1962
      %v1980 = vadd.f32 %v1955, %v1966
      %v1981 = vadd.f32 %v1956, %v1970
      %v1982 = vadd.f32 %v1957, %v1974
      %v1983 = vmul.f32 %v1979, 0.5
      %v1984 = vmul.f32 %v1980, 0.5
      %v1985 = vmul.f32 %v1981, 0.5
      %v1986 = vmul.f32 %v1982, 0.5
      %v1987 = vmul.f32 %v1979, 0.70710677
      %v1988 = vmul.f32 %v1980, 0.70710677
      %v1989 = vmul.f32 %v1981, 0.70710677
      %v1990 = vmul.f32 %v1982, 0.70710677
      %v1991 = verf.f32.pop %v1987
      %v1992 = verf.f32.pop %v1988
      %v1993 = verf.f32.pop %v1989
      %v1994 = verf.f32.pop %v1990
      %v1995 = vadd.f32 %v1991, 1.0
      %v1996 = vadd.f32 %v1992, 1.0
      %v1997 = vadd.f32 %v1993, 1.0
      %v1998 = vadd.f32 %v1994, 1.0
      %v1999 = vmul.f32 %v1983, %v1995
      %v2000 = vmul.f32 %v1984, %v1996
      %v2001 = vmul.f32 %v1985, %v1997
      %v2002 = vmul.f32 %v1986, %v1998
      %v2003 = vpack.c.bf16 %v1999, %v1999
      %v2004 = vpack.c.bf16 %v2000, %v2000
      %v2005 = vpack.c.bf16 %v2001, %v2001
      %v2006 = vpack.c.bf16 %v2002, %v2002
      %v2007 = vld [vmem:[%s10] sm:$0xf]
      %v2008 = vld [vmem:[%s10 + $0x4] sm:$0xf]
      %v2009 = vld [vmem:[%s10 + $0x8] sm:$0xf]
      %v2010 = vld [vmem:[%s10 + $0xc] sm:$0xf]
      %v2011 = vld [vmem:[%s10 + $0x10] sm:$0xf]
      %v2012 = vld [vmem:[%s10 + $0x14] sm:$0xf]
      %v2013 = vld [vmem:[%s10 + $0x18] sm:$0xf]
      %v2014 = vld [vmem:[%s10 + $0x1c] sm:$0xf]
      %v2015 = vld [vmem:[%s10 + $0x20] sm:$0xf]
      %v2016 = vld [vmem:[%s10 + $0x24] sm:$0xf]
      %v2017 = vld [vmem:[%s10 + $0x28] sm:$0xf]
      %v2018 = vld [vmem:[%s10 + $0x2c] sm:$0xf]
      %v2019 = vld [vmem:[%s10 + $0x30] sm:$0xf]
      %v2020 = vld [vmem:[%s10 + $0x34] sm:$0xf]
      %v2021 = vld [vmem:[%s10 + $0x38] sm:$0xf]
      %v2022 = vld [vmem:[%s10 + $0x3c] sm:$0xf]
      %v2023 = vld [vmem:[%s10 + $0x40] sm:$0xf]
      %v2024 = vld [vmem:[%s10 + $0x44] sm:$0xf]
      %v2025 = vld [vmem:[%s10 + $0x48] sm:$0xf]
      %v2026 = vld [vmem:[%s10 + $0x4c] sm:$0xf]
      %v2027 = vld [vmem:[%s10 + $0x50] sm:$0xf]
      %v2028 = vld [vmem:[%s10 + $0x54] sm:$0xf]
      %v2029 = vld [vmem:[%s10 + $0x58] sm:$0xf]
      %v2030 = vld [vmem:[%s10 + $0x5c] sm:$0xf]
      %v2031 = vld [vmem:[%s10 + $0x60] sm:$0xf]
      %v2032 = vld [vmem:[%s10 + $0x64] sm:$0xf]
      %v2033 = vld [vmem:[%s10 + $0x68] sm:$0xf]
      %v2034 = vld [vmem:[%s10 + $0x6c] sm:$0xf]
      %v2035 = vld [vmem:[%s10 + $0x70] sm:$0xf]
      %v2036 = vld [vmem:[%s10 + $0x74] sm:$0xf]
      %v2037 = vld [vmem:[%s10 + $0x78] sm:$0xf]
      %v2038 = vld [vmem:[%s10 + $0x7c] sm:$0xf]
      %v2039 = vld [vmem:[%s10 + $0x80] sm:$0xf]
      %v2040 = vld [vmem:[%s10 + $0x84] sm:$0xf]
      %v2041 = vld [vmem:[%s10 + $0x88] sm:$0xf]
      %v2042 = vld [vmem:[%s10 + $0x8c] sm:$0xf]
      %v2043 = vld [vmem:[%s10 + $0x90] sm:$0xf]
      %v2044 = vld [vmem:[%s10 + $0x94] sm:$0xf]
      %v2045 = vld [vmem:[%s10 + $0x98] sm:$0xf]
      %v2046 = vld [vmem:[%s10 + $0x9c] sm:$0xf]
      %v2047 = vld [vmem:[%s10 + $0xa0] sm:$0xf]
      %v2048 = vld [vmem:[%s10 + $0xa4] sm:$0xf]
      %v2049 = vld [vmem:[%s10 + $0xa8] sm:$0xf]
      %v2050 = vld [vmem:[%s10 + $0xac] sm:$0xf]
      %v2051 = vld [vmem:[%s10 + $0xb0] sm:$0xf]
      %v2052 = vld [vmem:[%s10 + $0xb4] sm:$0xf]
      %v2053 = vld [vmem:[%s10 + $0xb8] sm:$0xf]
      %v2054 = vld [vmem:[%s10 + $0xbc] sm:$0xf]
      %v2055 = vld [vmem:[%s10 + $0xc0] sm:$0xf]
      %v2056 = vld [vmem:[%s10 + $0xc4] sm:$0xf]
      %v2057 = vld [vmem:[%s10 + $0xc8] sm:$0xf]
      %v2058 = vld [vmem:[%s10 + $0xcc] sm:$0xf]
      %v2059 = vld [vmem:[%s10 + $0xd0] sm:$0xf]
      %v2060 = vld [vmem:[%s10 + $0xd4] sm:$0xf]
      %v2061 = vld [vmem:[%s10 + $0xd8] sm:$0xf]
      %v2062 = vld [vmem:[%s10 + $0xdc] sm:$0xf]
      %v2063 = vld [vmem:[%s10 + $0xe0] sm:$0xf]
      %v2064 = vld [vmem:[%s10 + $0xe4] sm:$0xf]
      %v2065 = vld [vmem:[%s10 + $0xe8] sm:$0xf]
      %v2066 = vld [vmem:[%s10 + $0xec] sm:$0xf]
      %v2067 = vld [vmem:[%s10 + $0xf0] sm:$0xf]
      %v2068 = vld [vmem:[%s10 + $0xf4] sm:$0xf]
      %v2069 = vld [vmem:[%s10 + $0xf8] sm:$0xf]
      %v2070 = vld [vmem:[%s10 + $0xfc] sm:$0xf]
      %v2071 = vld [vmem:[%s11] sm:$0x1]
      %v2073 = vlaneseq
      %v2074 = vshrl.u32 %v2073, 7
      %v2075 = vsub.s32 0, %v2074
      %v2076 = vrot.slane %v2071, %v2075
      %v2142 = vunpack.c.l.b16 %v2007
      %v2143 = vunpack.c.l.b16 %v2008
      %v2144 = vunpack.c.l.b16 %v2009
      %v2145 = vunpack.c.l.b16 %v2010
      %v2146 = vunpack.c.l.b16 %v2011
      %v2147 = vunpack.c.l.b16 %v2012
      %v2148 = vunpack.c.l.b16 %v2013
      %v2149 = vunpack.c.l.b16 %v2014
      %v2150 = vunpack.c.l.b16 %v2015
      %v2151 = vunpack.c.l.b16 %v2016
      %v2152 = vunpack.c.l.b16 %v2017
      %v2153 = vunpack.c.l.b16 %v2018
      %v2154 = vunpack.c.l.b16 %v2019
      %v2155 = vunpack.c.l.b16 %v2020
      %v2156 = vunpack.c.l.b16 %v2021
      %v2157 = vunpack.c.l.b16 %v2022
      %v2158 = vunpack.c.l.b16 %v2023
      %v2159 = vunpack.c.l.b16 %v2024
      %v2160 = vunpack.c.l.b16 %v2025
      %v2161 = vunpack.c.l.b16 %v2026
      %v2162 = vunpack.c.l.b16 %v2027
      %v2163 = vunpack.c.l.b16 %v2028
      %v2164 = vunpack.c.l.b16 %v2029
      %v2165 = vunpack.c.l.b16 %v2030
      %v2166 = vunpack.c.l.b16 %v2031
      %v2167 = vunpack.c.l.b16 %v2032
      %v2168 = vunpack.c.l.b16 %v2033
      %v2169 = vunpack.c.l.b16 %v2034
      %v2170 = vunpack.c.l.b16 %v2035
      %v2171 = vunpack.c.l.b16 %v2036
      %v2172 = vunpack.c.l.b16 %v2037
      %v2173 = vunpack.c.l.b16 %v2038
      %v2174 = vunpack.c.l.b16 %v2039
      %v2175 = vunpack.c.l.b16 %v2040
      %v2176 = vunpack.c.l.b16 %v2041
      %v2177 = vunpack.c.l.b16 %v2042
      %v2178 = vunpack.c.l.b16 %v2043
      %v2179 = vunpack.c.l.b16 %v2044
      %v2180 = vunpack.c.l.b16 %v2045
      %v2181 = vunpack.c.l.b16 %v2046
      %v2182 = vunpack.c.l.b16 %v2047
      %v2183 = vunpack.c.l.b16 %v2048
      %v2184 = vunpack.c.l.b16 %v2049
      %v2185 = vunpack.c.l.b16 %v2050
      %v2186 = vunpack.c.l.b16 %v2051
      %v2187 = vunpack.c.l.b16 %v2052
      %v2188 = vunpack.c.l.b16 %v2053
      %v2189 = vunpack.c.l.b16 %v2054
      %v2190 = vunpack.c.l.b16 %v2055
      %v2191 = vunpack.c.l.b16 %v2056
      %v2192 = vunpack.c.l.b16 %v2057
      %v2193 = vunpack.c.l.b16 %v2058
      %v2194 = vunpack.c.l.b16 %v2059
      %v2195 = vunpack.c.l.b16 %v2060
      %v2196 = vunpack.c.l.b16 %v2061
      %v2197 = vunpack.c.l.b16 %v2062
      %v2198 = vunpack.c.l.b16 %v2063
      %v2199 = vunpack.c.l.b16 %v2064
      %v2200 = vunpack.c.l.b16 %v2065
      %v2201 = vunpack.c.l.b16 %v2066
      %v2202 = vunpack.c.l.b16 %v2067
      %v2203 = vunpack.c.l.b16 %v2068
      %v2204 = vunpack.c.l.b16 %v2069
      %v2205 = vunpack.c.l.b16 %v2070
      %v2206 = vpack.c.b16 %v2143, %v2142
      %v2207 = vpack.c.b16 %v2145, %v2144
      %v2208 = vpack.c.b16 %v2147, %v2146
      %v2209 = vpack.c.b16 %v2149, %v2148
      %v2210 = vpack.c.b16 %v2151, %v2150
      %v2211 = vpack.c.b16 %v2153, %v2152
      %v2212 = vpack.c.b16 %v2155, %v2154
      %v2213 = vpack.c.b16 %v2157, %v2156
      %v2214 = vpack.c.b16 %v2159, %v2158
      %v2215 = vpack.c.b16 %v2161, %v2160
      %v2216 = vpack.c.b16 %v2163, %v2162
      %v2217 = vpack.c.b16 %v2165, %v2164
      %v2218 = vpack.c.b16 %v2167, %v2166
      %v2219 = vpack.c.b16 %v2169, %v2168
      %v2220 = vpack.c.b16 %v2171, %v2170
      %v2221 = vpack.c.b16 %v2173, %v2172
      %v2222 = vpack.c.b16 %v2175, %v2174
      %v2223 = vpack.c.b16 %v2177, %v2176
      %v2224 = vpack.c.b16 %v2179, %v2178
      %v2225 = vpack.c.b16 %v2181, %v2180
      %v2226 = vpack.c.b16 %v2183, %v2182
      %v2227 = vpack.c.b16 %v2185, %v2184
      %v2228 = vpack.c.b16 %v2187, %v2186
      %v2229 = vpack.c.b16 %v2189, %v2188
      %v2230 = vpack.c.b16 %v2191, %v2190
      %v2231 = vpack.c.b16 %v2193, %v2192
      %v2232 = vpack.c.b16 %v2195, %v2194
      %v2233 = vpack.c.b16 %v2197, %v2196
      %v2234 = vpack.c.b16 %v2199, %v2198
      %v2235 = vpack.c.b16 %v2201, %v2200
      %v2236 = vpack.c.b16 %v2203, %v2202
      %v2237 = vpack.c.b16 %v2205, %v2204
      %2270 = vmatprep.subr.bf16.mxu0 0
      %2271 = vmatpush1.bf16.msra.mxu0 %v2213
      %2272 = vmatprep.subr.bf16.mxu0 0
      %2273 = vmatpush1.bf16.msra.mxu0 %v2212
      %2274 = vmatprep.subr.bf16.mxu0 0
      %2275 = vmatpush1.bf16.msra.mxu0 %v2211
      %2276 = vmatprep.subr.bf16.mxu0 0
      %2277 = vmatpush1.bf16.msra.mxu0 %v2210
      %2278 = vmatprep.subr.bf16.mxu0 0
      %2279 = vmatpush1.bf16.msra.mxu0 %v2209
      %2280 = vmatprep.subr.bf16.mxu0 0
      %2281 = vmatpush1.bf16.msra.mxu0 %v2208
      %2282 = vmatprep.subr.bf16.mxu0 0
      %2283 = vmatpush1.bf16.msra.mxu0 %v2207
      %2284 = vmatprep.subr.bf16.mxu0 0
      %2285 = vmatpush1.bf16.msra.mxu0 %v2206
      %2286 = vmatprep.subr.bf16.mxu0 0
      %2287 = vmatpush2.bf16.msra.mxu0 %v2221
      %2288 = vmatprep.subr.bf16.mxu0 0
      %2289 = vmatpush2.bf16.msra.mxu0 %v2220
      %2290 = vmatprep.subr.bf16.mxu0 0
      %2291 = vmatpush2.bf16.msra.mxu0 %v2219
      %2292 = vmatprep.subr.bf16.mxu0 0
      %2293 = vmatpush2.bf16.msra.mxu0 %v2218
      %2294 = vmatprep.subr.bf16.mxu0 0
      %2295 = vmatpush2.bf16.msra.mxu0 %v2217
      %2296 = vmatprep.subr.bf16.mxu0 0
      %2297 = vmatpush2.bf16.msra.mxu0 %v2216
      %2298 = vmatprep.subr.bf16.mxu0 0
      %2299 = vmatpush2.bf16.msra.mxu0 %v2215
      %2300 = vmatprep.subr.bf16.mxu0 0
      %2301 = vmatpush2.bf16.msra.mxu0 %v2214
      %2302 = vmatprep.mubr.bf16.mxu0 %v2004
      %2303 = vmatmul.mubr.bf16.gmra.mxu0 %v2003
      %v2304 = vpop.f32.mrf.mxu0
      %v2305 = vadd.f32 %v2076, %v2304
      %v2306 = vpop.f32.mrf.mxu0
      %v2307 = vpop.f32.mrf.mxu0
      %v2308 = vpop.f32.mrf.mxu0
      %2309 = vdwg.mxu0
      %2310 = vmatprep.subr.bf16.mxu0 0
      %2311 = vmatpush1.bf16.msra.mxu0 %v2229
      %2312 = vmatprep.subr.bf16.mxu0 0
      %2313 = vmatpush1.bf16.msra.mxu0 %v2228
      %2314 = vmatprep.subr.bf16.mxu0 0
      %2315 = vmatpush1.bf16.msra.mxu0 %v2227
      %2316 = vmatprep.subr.bf16.mxu0 0
      %2317 = vmatpush1.bf16.msra.mxu0 %v2226
      %2318 = vmatprep.subr.bf16.mxu0 0
      %2319 = vmatpush1.bf16.msra.mxu0 %v2225
      %2320 = vmatprep.subr.bf16.mxu0 0
      %2321 = vmatpush1.bf16.msra.mxu0 %v2224
      %2322 = vmatprep.subr.bf16.mxu0 0
      %2323 = vmatpush1.bf16.msra.mxu0 %v2223
      %2324 = vmatprep.subr.bf16.mxu0 0
      %2325 = vmatpush1.bf16.msra.mxu0 %v2222
      %2326 = vmatprep.subr.bf16.mxu0 0
      %2327 = vmatpush2.bf16.msra.mxu0 %v2237
      %2328 = vmatprep.subr.bf16.mxu0 0
      %2329 = vmatpush2.bf16.msra.mxu0 %v2236
      %2330 = vmatprep.subr.bf16.mxu0 0
      %2331 = vmatpush2.bf16.msra.mxu0 %v2235
      %2332 = vmatprep.subr.bf16.mxu0 0
      %2333 = vmatpush2.bf16.msra.mxu0 %v2234
      %2334 = vmatprep.subr.bf16.mxu0 0
      %2335 = vmatpush2.bf16.msra.mxu0 %v2233
      %2336 = vmatprep.subr.bf16.mxu0 0
      %2337 = vmatpush2.bf16.msra.mxu0 %v2232
      %2338 = vmatprep.subr.bf16.mxu0 0
      %2339 = vmatpush2.bf16.msra.mxu0 %v2231
      %2340 = vmatprep.subr.bf16.mxu0 0
      %2341 = vmatpush2.bf16.msra.mxu0 %v2230
      %2342 = vmatprep.mubr.bf16.mxu0 %v2006
      %2343 = vmatmul.mubr.bf16.gmra.mxu0 %v2005
      %v2344 = vpop.f32.mrf.mxu0
      %v2345 = vadd.f32 %v2305, %v2344
      %v2346 = vpop.f32.mrf.mxu0
      %v2347 = vpop.f32.mrf.mxu0
      %v2348 = vpop.f32.mrf.mxu0
      %2349 = vdwg.mxu0
      %v2350 = vld [vmem:[%s12] sm:$0x1]
      %v2351 = vld [vmem:[%s13] sm:$0x1]
      %2352 = vadd.xlane.f32.xlu0 %v2345
      %v2353 = vpop.xlane.xlu0 %2352
      %v2354 = vrcp.pop 128.0
      %v2355 = vmul.f32 %v2353, %v2354
      %v2356 = vsub.f32 %v2345, %v2355
      %v2357 = vmul.f32 %v2356, %v2356
      %2358 = vadd.xlane.f32.xlu0 %v2357
      %v2359 = vpop.xlane.xlu0 %2358
      %v2360 = vmul.f32 %v2359, %v2354
      %v2361 = vadd.f32 %v2360, 1e-05
      %v2362 = vrsqrt.pop %v2361
      %v2363 = vmul.f32 %v2356, %v2362
      %v2365 = vlaneseq
      %v2366 = vshrl.u32 %v2365, 7
      %v2367 = vsub.s32 0, %v2366
      %v2368 = vrot.slane %v2350, %v2367
      %v2370 = vmul.f32 %v2363, %v2368
      %v2372 = vlaneseq
      %v2373 = vshrl.u32 %v2372, 7
      %v2374 = vsub.s32 0, %v2373
      %v2375 = vrot.slane %v2351, %v2374
      %v2377 = vadd.f32 %v2370, %v2375
      %v2378 = vmul.f32 %v2377, 0.5
      %v2379 = vmul.f32 %v2377, 0.70710677
      %v2380 = verf.f32.pop %v2379
      %v2381 = vadd.f32 %v2380, 1.0
      %v2382 = vmul.f32 %v2378, %v2381
      %v2383 = vpack.c.bf16 %v2382, %v2382
      %v2384 = vld [vmem:[%s14] sm:$0xf]
      %v2385 = vld [vmem:[%s14 + $0x4] sm:$0xf]
      %v2386 = vld [vmem:[%s14 + $0x8] sm:$0xf]
      %v2387 = vld [vmem:[%s14 + $0xc] sm:$0xf]
      %v2388 = vld [vmem:[%s14 + $0x10] sm:$0xf]
      %v2389 = vld [vmem:[%s14 + $0x14] sm:$0xf]
      %v2390 = vld [vmem:[%s14 + $0x18] sm:$0xf]
      %v2391 = vld [vmem:[%s14 + $0x1c] sm:$0xf]
      %v2392 = vld [vmem:[%s14 + $0x20] sm:$0xf]
      %v2393 = vld [vmem:[%s14 + $0x24] sm:$0xf]
      %v2394 = vld [vmem:[%s14 + $0x28] sm:$0xf]
      %v2395 = vld [vmem:[%s14 + $0x2c] sm:$0xf]
      %v2396 = vld [vmem:[%s14 + $0x30] sm:$0xf]
      %v2397 = vld [vmem:[%s14 + $0x34] sm:$0xf]
      %v2398 = vld [vmem:[%s14 + $0x38] sm:$0xf]
      %v2399 = vld [vmem:[%s14 + $0x3c] sm:$0xf]
      %v2400 = vld [vmem:[%s15] sm:$0x1]
      %v2402 = vlaneseq
      %v2403 = vshrl.u32 %v2402, 7
      %v2404 = vsub.s32 0, %v2403
      %v2405 = vrot.slane %v2400, %v2404
      %v2423 = vunpack.c.l.b16 %v2384
      %v2424 = vunpack.c.l.b16 %v2385
      %v2425 = vunpack.c.l.b16 %v2386
      %v2426 = vunpack.c.l.b16 %v2387
      %v2427 = vunpack.c.l.b16 %v2388
      %v2428 = vunpack.c.l.b16 %v2389
      %v2429 = vunpack.c.l.b16 %v2390
      %v2430 = vunpack.c.l.b16 %v2391
      %v2431 = vunpack.c.l.b16 %v2392
      %v2432 = vunpack.c.l.b16 %v2393
      %v2433 = vunpack.c.l.b16 %v2394
      %v2434 = vunpack.c.l.b16 %v2395
      %v2435 = vunpack.c.l.b16 %v2396
      %v2436 = vunpack.c.l.b16 %v2397
      %v2437 = vunpack.c.l.b16 %v2398
      %v2438 = vunpack.c.l.b16 %v2399
      %v2439 = vpack.c.b16 %v2424, %v2423
      %v2440 = vpack.c.b16 %v2426, %v2425
      %v2441 = vpack.c.b16 %v2428, %v2427
      %v2442 = vpack.c.b16 %v2430, %v2429
      %v2443 = vpack.c.b16 %v2432, %v2431
      %v2444 = vpack.c.b16 %v2434, %v2433
      %v2445 = vpack.c.b16 %v2436, %v2435
      %v2446 = vpack.c.b16 %v2438, %v2437
      %2455 = vmatprep.subr.bf16.mxu0 0
      %2456 = vmatpush1.bf16.msra.mxu0 %v2446
      %2457 = vmatprep.subr.bf16.mxu0 0
      %2458 = vmatpush1.bf16.msra.mxu0 %v2445
      %2459 = vmatprep.subr.bf16.mxu0 0
      %2460 = vmatpush1.bf16.msra.mxu0 %v2444
      %2461 = vmatprep.subr.bf16.mxu0 0
      %2462 = vmatpush1.bf16.msra.mxu0 %v2443
      %2463 = vmatprep.subr.bf16.mxu0 0
      %2464 = vmatpush1.bf16.msra.mxu0 %v2442
      %2465 = vmatprep.subr.bf16.mxu0 0
      %2466 = vmatpush1.bf16.msra.mxu0 %v2441
      %2467 = vmatprep.subr.bf16.mxu0 0
      %2468 = vmatpush1.bf16.msra.mxu0 %v2440
      %2469 = vmatprep.subr.bf16.mxu0 0
      %2470 = vmatpush1.bf16.msra.mxu0 %v2439
      %2471 = vmatprep.subr.bf16.mxu0 0
      %2472 = vmatpush2.bf16.msra.mxu0 0
      %2473 = vmatprep.subr.bf16.mxu0 0
      %2474 = vmatpush2.bf16.msra.mxu0 0
      %2475 = vmatprep.subr.bf16.mxu0 0
      %2476 = vmatpush2.bf16.msra.mxu0 0
      %2477 = vmatprep.subr.bf16.mxu0 0
      %2478 = vmatpush2.bf16.msra.mxu0 0
      %2479 = vmatprep.subr.bf16.mxu0 0
      %2480 = vmatpush2.bf16.msra.mxu0 0
      %2481 = vmatprep.subr.bf16.mxu0 0
      %2482 = vmatpush2.bf16.msra.mxu0 0
      %2483 = vmatprep.subr.bf16.mxu0 0
      %2484 = vmatpush2.bf16.msra.mxu0 0
      %2485 = vmatprep.subr.bf16.mxu0 0
      %2486 = vmatpush2.bf16.msra.mxu0 0
      %2487 = vmatprep.mubr.bf16.mxu0 0
      %2488 = vmatmul.mubr.bf16.gmra.mxu0 %v2383
      %v2489 = vpop.f32.mrf.mxu0
      %v2490 = vadd.f32 %v2405, %v2489
      %v2491 = vpop.f32.mrf.mxu0
      %v2492 = vpop.f32.mrf.mxu0
      %v2493 = vpop.f32.mrf.mxu0
      %2494 = vdwg.mxu0
      %vm2495 = vcmask 23552
      %v2496 = vsel %vm2495, %v2490, -inf
      %2497 = vmax.xlane.f32.xlu0 %v2496
      %v2498 = vpop.xlane.xlu0 %2497
      %v2499 = vsub.f32 %v2490, %v2498
      %v2500 = vmul.f32 %v2499, 1.442695
      %v2501 = vpow.pop %v2500
      %v2502 = vsel %vm2495, %v2501, 0.0
      %2503 = vadd.xlane.f32.xlu0 %v2502
      %v2504 = vpop.xlane.xlu0 %2503
      %v2505 = vrcp.pop %v2504
      %v2506 = vmul.f32 %v2501, %v2505
      %v2507 = vlog2.pop %v2504
      %v2508 = vmul.f32 %v2507, 0.6931472
      %v2509 = vsub.f32 %v2499, %v2508
      %s2510 = smul.u32 %s35, 8
      %v2511 = vlaneseq
      %v2512 = vshrl.u32 %v2511, 7
      %vm2513 = vcmp.eq.s32.totalorder %v2512, 0
      %s2514 = sld [smem:[#allocation3 + %s2510]]
      %v2515 = vstv %s2514
      %v2516 = vsel %vm2513, %v2515, 0
      %vm2517 = vcmp.eq.s32.totalorder %v2512, 1
      %s2518 = sadd.s32 %s2510, 1
      %s2519 = sld [smem:[#allocation3 + %s2518]]
      %v2520 = vstv %s2519
      %v2521 = vsel %vm2517, %v2520, %v2516
      %vm2522 = vcmp.eq.s32.totalorder %v2512, 2
      %s2523 = sadd.s32 %s2510, 2
      %s2524 = sld [smem:[#allocation3 + %s2523]]
      %v2525 = vstv %s2524
      %v2526 = vsel %vm2522, %v2525, %v2521
      %vm2527 = vcmp.eq.s32.totalorder %v2512, 3
      %s2528 = sadd.s32 %s2510, 3
      %s2529 = sld [smem:[#allocation3 + %s2528]]
      %v2530 = vstv %s2529
      %v2531 = vsel %vm2527, %v2530, %v2526
      %vm2532 = vcmp.eq.s32.totalorder %v2512, 4
      %s2533 = sadd.s32 %s2510, 4
      %s2534 = sld [smem:[#allocation3 + %s2533]]
      %v2535 = vstv %s2534
      %v2536 = vsel %vm2532, %v2535, %v2531
      %vm2537 = vcmp.eq.s32.totalorder %v2512, 5
      %s2538 = sadd.s32 %s2510, 5
      %s2539 = sld [smem:[#allocation3 + %s2538]]
      %v2540 = vstv %s2539
      %v2541 = vsel %vm2537, %v2540, %v2536
      %vm2542 = vcmp.eq.s32.totalorder %v2512, 6
      %s2543 = sadd.s32 %s2510, 6
      %s2544 = sld [smem:[#allocation3 + %s2543]]
      %v2545 = vstv %s2544
      %v2546 = vsel %vm2542, %v2545, %v2541
      %vm2547 = vcmp.eq.s32.totalorder %v2512, 7
      %s2548 = sadd.s32 %s2510, 7
      %s2549 = sld [smem:[#allocation3 + %s2548]]
      %v2550 = vstv %s2549
      %v2551 = vsel %vm2547, %v2550, %v2546
      %vm2552 = vcmp.eq.s32.totalorder %v963, %v2551
      %v2553 = vsel %vm2552, 1, 0
      %v2554 = vcvt.s32.f32 %v2553
      %v2555 = vmul.f32 %v2554, %v2509
      %v2556 = vsel %vm2495, %v2555, 0.0
      %2557 = vadd.xlane.f32.xlu0 %v2556
      %v2558 = vpop.xlane.xlu0 %2557
      %v2559 = vsub.f32 0.0, %v2558
      %2560 = vst [vmem:[%s503] sm:$0xff] 0.0
      %2561 = vst.msk [vmem:[%s503] sm:$0xff] %vm2495, %v2490
      %2563 = vrot.lane.b32.xlu0 %v2506, 3
      %v2564 = vpop.permute.xlu0 %2563
      %vm2566 = vcmask 48152
      %2567 = vst.msk [vmem:[%s503] sm:$0xff] %vm2566, %v2564
      %vm2568 = vcmask 56368
      %2569 = vst.msk [vmem:[%s503] sm:$0xff] %vm2568, %v2559
      %p2570 = scmp.lt.s32.totalorder %s35, 1
      %s2571 = scalar_select %p2570, %s35, 1
      %s2572 = smul.addr %s2571, 8
      %s2573 = scalar_lea.vmem %s16, %s2572
      // Predicated region
      $region81: #{_enhanced_sentiment_head.1} parent=79 // pred_check
        %p2574 = pneg %p373
      $region82: #{_enhanced_sentiment_head.1} parent=79 // pred_check_branch
        %2576 = sbr.rel (%p2574) target = $region84
      $region83: #{_enhanced_sentiment_head.1} parent=79 // pred_region
        _
      $region84: #{_enhanced_sentiment_head.1} parent=79 // pred_fallthru
        _
    $region80: #{_enhanced_sentiment_head.1} parent=5 // pred_fallthru
      _
    %p2577 = scmp.le.s32.totalorder 2, %s30
    // Predicated region
    $region85: #{_enhanced_sentiment_head.1} parent=5 // pred_check
      %p2578 = pneg %p2577
    $region86: #{_enhanced_sentiment_head.1} parent=5 // pred_check_branch
      %2580 = sbr.rel (%p2578) target = $region88
    $region87: #{_enhanced_sentiment_head.1} parent=5 // pred_region
      %s2581 = ssub.s32 %s30, 2
      // Predicated region
      $region89: #{_enhanced_sentiment_head.1} parent=87 // pred_check
        %p2582 = pneg %p379
      $region90: #{_enhanced_sentiment_head.1} parent=87 // pred_check_branch
        %2584 = sbr.rel (%p2582) target = $region92
      $region91: #{_enhanced_sentiment_head.1} parent=87 // pred_region
        %p2585 = scmp.lt.s32.totalorder %s36, 1
        %s2586 = scalar_select %p2585, %s36, 1
        %s2587 = smul.addr %s2586, 8
        %s2588 = scalar_lea.vmem %s16, %s2587
      $region92: #{_enhanced_sentiment_head.1} parent=87 // pred_fallthru
        _
    $region88: #{_enhanced_sentiment_head.1} parent=5 // pred_fallthru
      _
  $region6: #{_enhanced_sentiment_head.1} parent=0 // loop_footer
    %s34 = sadd.s32 1, %s30
  $region7: #{_enhanced_sentiment_head.1} parent=0 // loop_footer_branch
    %29 = sbr.rel target = $region3
  $region8: #{_enhanced_sentiment_head.1} parent=0 // loop_exit
    _

</llo_original>
